<compile_context>
chip_gen: v5e
topology: v5e:2x2
jax: 0.10.0
libtpu: 0.0.40
codegen_flags: <defaults>
</compile_context>

<pallas_src>
import functools

import jax
import jax.numpy as jnp
from jax import lax
from jax.experimental import pallas as pl
from jax.experimental.pallas import tpu as pltpu

# ----------------------------------------------------------------------------
# Static config (stands in for the module-level globals of the PyTorch script)
# ----------------------------------------------------------------------------
IDS = {"cat_a": list(range(5)), "cat_b": list(range(7))}   # vocab sizes 5 and 7
CAT_IDX = (0, 1)                                           # categorical_features_indices
NOT_CAT_IDX = (2, 3)                                       # not_categorical_features_indices
INPUT_DIM = 4
HIDDEN_DIM = 64                                            # heads = HIDDEN_DIM // 64 = 1
OUTPUT_DIM = 4
NUM_LAYERS = 2
BATCH = 2
SEQ = 8

CAT_SIZES = tuple(len(v) + 1 for v in IDS.values())        # (6, 8)
HEAD_COLS = 2 * OUTPUT_DIM + sum(CAT_SIZES)                # 4 + 4 + 6 + 8 = 22
HEAD_PAD = 128                                             # lane-dense fused head output
IN_ROWS = sum(CAT_SIZES) + len(NOT_CAT_IDX)                # 14 emb rows + 2 feat rows = 16


# ----------------------------------------------------------------------------
# In-kernel helpers
# ----------------------------------------------------------------------------
def _ln(x, g, b, eps=1e-5):
    # var = E[x^2] - E[x]^2 : the two cross-lane reductions are independent, so they can
    # overlap in the XLU instead of serializing reduce -> VPU -> reduce.
    m1 = jnp.mean(x, axis=-1, keepdims=True)
    m2 = jnp.mean(x * x, axis=-1, keepdims=True)
    return (x - m1) * lax.rsqrt(m2 - m1 * m1 + eps) * g + b


# ----------------------------------------------------------------------------
# One fused kernel: input projection + L decoder layers + final LN + heads + argmax scatter
# ----------------------------------------------------------------------------
def fused_forward_kernel(idx_ref, feats_ref, w_ref, c_ref, p_ref, out_ref,
                         *, d, n_layers, in_rows):
    D = d
    BS = idx_ref.shape[0]
    bf16 = jnp.bfloat16
    f32 = jnp.float32

    # ---- positional slab: [cos | sin | block-diagonal causal additive bias] ----
    cos = p_ref[:, 0:D]                              # (BS, D)
    sin = p_ref[:, D:2 * D]
    attn_bias = p_ref[:, 2 * D:2 * D + BS]           # (BS, BS)

    # ---- f32 vector slab accessor (row r, width w) ----
    def vec(r, w):
        return c_ref[r:r + 1, 0:w]                   # (1, w), broadcasts over rows

    # ---- input projection: two-hot(+continuous feats) @ [emb0/nc ; emb1/nc ; feat_w] + b ----
    col = lax.broadcasted_iota(jnp.int32, (BS, in_rows), 1)
    two_hot = col == idx_ref[:, 0:1]                 # indices already offset host-side
    for j in range(1, idx_ref.shape[1]):
        two_hot = two_hot | (col == idx_ref[:, j:j + 1])
    inp = two_hot.astype(f32)
    n_feat = feats_ref.shape[1]
    for j in range(n_feat):                          # continuous features in the last rows
        inp = inp + jnp.where(col == in_rows - n_feat + j, feats_ref[:, j:j + 1], 0.0)
    h = jnp.dot(inp, c_ref[0:in_rows, 0:D],
                preferred_element_type=f32) + vec(in_rows, D)

    # ---- decoder layers (single head: HIDDEN_DIM == 64) ----
    # TODO(synk): x-transformers Decoder approximated as a pre-norm causal transformer with
    # rotary embeddings and (tanh-)GELU MLP, synthetic weights; for HIDDEN_DIM > 64 the score
    # matmul must become block-structured per head instead of one (BS,BS) matmul over full D.
    for l in range(n_layers):
        vb = in_rows + 1 + 8 * l                     # vector-slab row base for this layer
        wb = 16 * D * l                              # weight-slab lane base for this layer

        # -- attention (pre-norm, causal, rotary; scale + rotate-half folded into Wqkv) --
        xn = _ln(h, vec(vb + 0, D), vec(vb + 1, D))
        qkv = jnp.dot(xn.astype(bf16), w_ref[:, wb:wb + 5 * D],
                      preferred_element_type=f32) + vec(vb + 2, 5 * D)
        qh = qkv[:, 0:D] * cos + qkv[:, 3 * D:4 * D] * sin       # rope(q) * Dh**-0.5
        kh = qkv[:, D:2 * D] * cos + qkv[:, 4 * D:5 * D] * sin   # rope(k)
        v = qkv[:, 2 * D:3 * D]
        s = lax.dot_general(qh.astype(bf16), kh.astype(bf16),
                            (((1,), (1,)), ((), ())),
                            preferred_element_type=f32) + attn_bias
        s = s - jnp.max(s, axis=-1, keepdims=True)
        p = jnp.exp(s)
        p = p * pl.reciprocal(jnp.sum(p, axis=-1, keepdims=True), approx=True)
        attn = jnp.dot(p.astype(bf16), v.astype(bf16), preferred_element_type=f32)
        attn = jnp.dot(attn.astype(bf16), w_ref[:, wb + 6 * D:wb + 7 * D],
                       preferred_element_type=f32) + vec(vb + 3, D)
        h = h + attn

        # -- feed-forward (pre-norm, tanh-GELU) --
        xn2 = _ln(h, vec(vb + 4, D), vec(vb + 5, D))
        ff = jnp.dot(xn2.astype(bf16), w_ref[:, wb + 8 * D:wb + 12 * D],
                     preferred_element_type=f32) + vec(vb + 6, 4 * D)
        ff = jax.nn.gelu(ff, approximate=True)
        ff = lax.dot_general(ff.astype(bf16), w_ref[:, wb + 12 * D:wb + 16 * D],
                             (((1,), (1,)), ((), ())),           # wff2 stored transposed
                             preferred_element_type=f32) + vec(vb + 7, D)
        h = h + ff

    # ---- final LayerNorm + fused heads [fc_u | fc_o | cat0 | cat1 | pad] ----
    vf = in_rows + 1 + 8 * n_layers
    h = _ln(h, vec(vf, D), vec(vf + 1, D))
    hb = 16 * D * n_layers
    heads = jnp.dot(h.astype(bf16), w_ref[:, hb:hb + HEAD_PAD],
                    preferred_element_type=f32) + vec(vf + 2, HEAD_PAD)

    # ---- in-kernel categorical argmax -> scatter into u's categorical columns ----
    colh = lax.broadcasted_iota(jnp.int32, (BS, HEAD_PAD), 1)
    colf = colh.astype(f32)
    out = heads
    off = 2 * OUTPUT_DIM
    for i, ind in enumerate(CAT_IDX):
        lo, hi = off, off + CAT_SIZES[i]
        in_rng = (colh >= lo) & (colh < hi)
        vals = jnp.where(in_rng, heads, -jnp.inf)
        mx = jnp.max(vals, axis=-1, keepdims=True)
        first = jnp.min(jnp.where(in_rng & (vals == mx), colf, float(hi)),
                        axis=-1, keepdims=True)                  # first argmax (abs column)
        out = jnp.where(colh == ind, first - float(lo + 1), out)  # argmax - 1
        off = hi
    out_ref[...] = out.astype(out_ref.dtype)


# ----------------------------------------------------------------------------
# Host-side constant tables
# ----------------------------------------------------------------------------
def rope_tables(seq, dh, theta=10000.0):
    inv = 1.0 / (theta ** (jnp.arange(0, dh, 2, dtype=jnp.float32) / dh))
    t = jnp.arange(seq, dtype=jnp.float32)
    ang = jnp.outer(t, inv)                                  # (S, Dh//2)
    cos = jnp.concatenate([jnp.cos(ang), jnp.cos(ang)], axis=-1)
    sin = jnp.concatenate([jnp.sin(ang), jnp.sin(ang)], axis=-1)
    return cos.astype(jnp.float32), sin.astype(jnp.float32)


def rot_half_matrix(dh):
    # x @ R == concat([-x2, x1]) ("rotate half"), used only host-side to fold RoPE into Wq/Wk.
    half = dh // 2
    eye = jnp.eye(half, dtype=jnp.float32)
    z = jnp.zeros((half, half), jnp.float32)
    top = jnp.concatenate([z, eye], axis=1)
    bot = jnp.concatenate([-eye, z], axis=1)
    return jnp.concatenate([top, bot], axis=0)


# ----------------------------------------------------------------------------
# Parameters: synthetic init + one-time packing into kernel slabs
# ----------------------------------------------------------------------------
def init_params(key):
    kit = iter(jax.random.split(key, 64))

    def nrm(shape, scale=0.02):
        return scale * jax.random.normal(next(kit), shape, jnp.float32)

    L, D = NUM_LAYERS, HIDDEN_DIM
    H = max(1, D // 64)
    Dh = D // H
    assert H == 1, "kernel is specialized to a single attention head (HIDDEN_DIM == 64)"
    scale = Dh ** -0.5
    R = rot_half_matrix(Dh)

    # ---- raw (synthetic) module weights ----
    emb = [nrm((n, D)) for n in CAT_SIZES]
    feat_w = nrm((len(NOT_CAT_IDX), D))
    feat_b = jnp.zeros((D,), jnp.float32)
    ln1_g = jnp.ones((L, D)); ln1_b = jnp.zeros((L, D))
    ln2_g = jnp.ones((L, D)); ln2_b = jnp.zeros((L, D))
    wqkv = nrm((L, D, 3 * D)); bqkv = jnp.zeros((L, 3 * D))
    wo = nrm((L, D, D));       bo = jnp.zeros((L, D))
    wff1 = nrm((L, D, 4 * D)); bff1 = jnp.zeros((L, 4 * D))
    wff2 = nrm((L, 4 * D, D)); bff2 = jnp.zeros((L, D))
    lnf_g = jnp.ones((D,));    lnf_b = jnp.zeros((D,))
    head_w = jnp.concatenate([nrm((D, OUTPUT_DIM)), nrm((D, OUTPUT_DIM))]
                             + [nrm((D, n)) for n in CAT_SIZES], axis=1)     # (D, 22)
    head_b = jnp.zeros((HEAD_COLS,), jnp.float32)

    # ---- bf16 weight slab: per layer [wqkv5|pad | wo|pad | wff1 | wff2^T], then head_w ----
    wblocks, bqkv5_rows = [], []
    for l in range(L):
        wq = wqkv[l, :, :D] * scale                     # attention scale folded into q path
        wk = wqkv[l, :, D:2 * D]
        wv = wqkv[l, :, 2 * D:]
        bq = bqkv[l, :D] * scale
        bk = bqkv[l, D:2 * D]
        bv = bqkv[l, 2 * D:]
        wqkv5 = jnp.concatenate([wq, wk, wv, wq @ R, wk @ R], axis=1)        # (D, 5D)
        bqkv5_rows.append(jnp.concatenate([bq, bk, bv, bq @ R, bk @ R]))     # (5D,)
        wblocks += [jnp.pad(wqkv5, ((0, 0), (0, D))),   # 5D -> 6D (128-aligned offsets)
                    jnp.pad(wo[l], ((0, 0), (0, D))),   #  D -> 2D
                    wff1[l],                            # 4D
                    wff2[l].T]                          # 4D (stored transposed)
    wblocks.append(jnp.pad(head_w, ((0, 0), (0, HEAD_PAD - HEAD_COLS))))     # 2D
    wslab = jnp.concatenate(wblocks, axis=1).astype(jnp.bfloat16)            # (D, 16D*L+128)

    # ---- f32 vector/constant slab: input-proj table + LN params + all biases ----
    CW = 6 * D                                          # widest row (bqkv5 is 5D)

    def crow(v):
        v = jnp.asarray(v, jnp.float32).reshape(1, -1)
        return jnp.pad(v, ((0, 0), (0, CW - v.shape[1])))

    in_w = jnp.concatenate([e / len(CAT_IDX) for e in emb] + [feat_w], axis=0)  # (IN_ROWS, D)
    rows = [jnp.pad(in_w, ((0, 0), (0, CW - D))), crow(feat_b)]
    for l in range(L):
        rows += [crow(ln1_g[l]), crow(ln1_b[l]), crow(bqkv5_rows[l]), crow(bo[l]),
                 crow(ln2_g[l]), crow(ln2_b[l]), crow(bff1[l]), crow(bff2[l])]
    rows += [crow(lnf_g), crow(lnf_b), crow(jnp.pad(head_b, (0, HEAD_PAD - HEAD_COLS)))]
    cslab = jnp.concatenate(rows, axis=0)               # (IN_ROWS + 1 + 8L + 3, 6D)

    # ---- f32 positional slab: [cos | sin | block-diagonal causal additive bias] ----
    BS = BATCH * SEQ
    cos, sin = rope_tables(SEQ, Dh)
    cos = jnp.tile(cos, (BATCH, H)); sin = jnp.tile(sin, (BATCH, H))         # (BS, D)
    r = jnp.arange(BS)[:, None]
    c = jnp.arange(BS)[None, :]
    ok = (r // SEQ == c // SEQ) & (c % SEQ <= r % SEQ)
    bias = jnp.where(ok, 0.0, -1e30).astype(jnp.float32)
    pslab = jnp.concatenate([cos, sin, bias], axis=1)    # (BS, 2D + BS)

    return {
        'wslab': wslab,
        'cslab': cslab,
        'pslab': pslab,
        # +1 PyTorch index offset and the stacked-table row offset for the 2nd embedding
        'idx_offset': jnp.array([1, 1 + CAT_SIZES[0]], jnp.int32),
    }


# ----------------------------------------------------------------------------
# Wrapper around the single (gridless) pallas_call
# ----------------------------------------------------------------------------
def fused_forward(params, idx, feats):
    BS = idx.shape[0]
    kernel = functools.partial(fused_forward_kernel, d=HIDDEN_DIM,
                               n_layers=NUM_LAYERS, in_rows=IN_ROWS)
    return pl.pallas_call(
        kernel,
        out_shape=jax.ShapeDtypeStruct((BS, HEAD_PAD), jnp.float32),
        in_specs=[pl.BlockSpec(memory_space=pltpu.MemorySpace.VMEM)] * 5,
        out_specs=pl.BlockSpec(memory_space=pltpu.MemorySpace.VMEM),
    )(idx, feats, params['wslab'], params['cslab'], params['pslab'])


def transformer_forward(params, x):
    B, S, _ = x.shape
    BS = B * S

    # Remaining host-side glue: feature slicing in, output slicing/reshaping into (u, o, c).
    idx = (x[:, :, jnp.asarray(CAT_IDX)].reshape(BS, len(CAT_IDX)).astype(jnp.int32)
           + params['idx_offset'])
    feats = x[:, :, jnp.asarray(NOT_CAT_IDX)].reshape(BS, len(NOT_CAT_IDX))

    heads = fused_forward(params, idx, feats)            # (BS, HEAD_PAD)

    # u's categorical columns were already overwritten with (argmax - 1) inside the kernel.
    u = heads[:, :OUTPUT_DIM].reshape(B, S, OUTPUT_DIM)
    o = heads[:, OUTPUT_DIM:2 * OUTPUT_DIM].reshape(B, S, OUTPUT_DIM)
    c, off = [], 2 * OUTPUT_DIM
    for n in CAT_SIZES:
        c.append(heads[:, off:off + n].reshape(B, S, n))
        off += n
    return u, o, c


# ----------------------------------------------------------------------------
if __name__ == "__main__":
    key = jax.random.PRNGKey(0)
    kp, k1, k2, k3 = jax.random.split(key, 4)

    params = init_params(kp)

    vocab_sizes = [len(v) for v in IDS.values()]
    cat0 = jax.random.randint(k1, (BATCH, SEQ), -1, vocab_sizes[0]).astype(jnp.float32)
    cat1 = jax.random.randint(k2, (BATCH, SEQ), -1, vocab_sizes[1]).astype(jnp.float32)
    cont = jax.random.normal(k3, (BATCH, SEQ, len(NOT_CAT_IDX)), jnp.float32)
    x = jnp.concatenate([cat0[..., None], cat1[..., None], cont], axis=-1)  # (B, S, F)

    fwd = jax.jit(transformer_forward)
    u, o, c = fwd(params, x)
    jax.block_until_ready((u, o, c))

    assert u.shape == (BATCH, SEQ, OUTPUT_DIM)
    assert o.shape == (BATCH, SEQ, OUTPUT_DIM)
    assert [ci.shape for ci in c] == [(BATCH, SEQ, v + 1) for v in vocab_sizes]
    assert bool(jnp.isfinite(u).all()) and bool(jnp.isfinite(o).all())
    # categorical columns of u must hold integer argmax-1 values in [-1, vocab-1]
    for i, ind in enumerate(CAT_IDX):
        vals = u[:, :, ind]
        assert bool(((vals >= -1) & (vals <= vocab_sizes[i])).all())
    print("KERNEL_OK")
</pallas_src>

<mosaic_0001>
module attributes {stable_mosaic.version = 11 : i64} {
  func.func @fused_forward_kernel(%arg0: memref<16x2xi32, #tpu.memory_space<vmem>>, %arg1: memref<16x2xf32, #tpu.memory_space<vmem>>, %arg2: memref<64x2176xbf16, #tpu.memory_space<vmem>>, %arg3: memref<36x384xf32, #tpu.memory_space<vmem>>, %arg4: memref<16x144xf32, #tpu.memory_space<vmem>>, %arg5: memref<16x128xf32, #tpu.memory_space<vmem>>) attributes {dimension_semantics = [], scalar_prefetch = 0 : i64, scratch_operands = 0 : i64, tpu.core_type = #tpu.core_type<tc>} {
    %c0 = arith.constant 0 : index
    %c0_0 = arith.constant 0 : index
    %0 = vector.load %arg4[%c0, %c0_0] : memref<16x144xf32, #tpu.memory_space<vmem>>, vector<16x64xf32>
    %c0_1 = arith.constant 0 : index
    %c64 = arith.constant 64 : index
    %1 = vector.load %arg4[%c0_1, %c64] : memref<16x144xf32, #tpu.memory_space<vmem>>, vector<16x64xf32>
    %c0_2 = arith.constant 0 : index
    %c128 = arith.constant 128 : index
    %2 = vector.load %arg4[%c0_2, %c128] : memref<16x144xf32, #tpu.memory_space<vmem>>, vector<16x16xf32>
    %3 = tpu.iota {dimensions = array<i32: 1>} : vector<16x16xi32>
    %c0_3 = arith.constant 0 : index
    %c0_4 = arith.constant 0 : index
    %4 = vector.load %arg0[%c0_3, %c0_4] : memref<16x2xi32, #tpu.memory_space<vmem>>, vector<16x1xi32>
    %5 = vector.broadcast %4 : vector<16x1xi32> to vector<16x16xi32>
    %6 = arith.cmpi eq, %3, %5 : vector<16x16xi32>
    %c0_5 = arith.constant 0 : index
    %c1 = arith.constant 1 : index
    %7 = vector.load %arg0[%c0_5, %c1] : memref<16x2xi32, #tpu.memory_space<vmem>>, vector<16x1xi32>
    %8 = vector.broadcast %7 : vector<16x1xi32> to vector<16x16xi32>
    %9 = arith.cmpi eq, %3, %8 : vector<16x16xi32>
    %10 = arith.ori %6, %9 : vector<16x16xi1>
    %11 = arith.extui %10 : vector<16x16xi1> to vector<16x16xi32>
    %12 = arith.sitofp %11 : vector<16x16xi32> to vector<16x16xf32>
    %c14_i32 = arith.constant 14 : i32
    %13 = vector.broadcast %c14_i32 : i32 to vector<16x16xi32>
    %14 = arith.cmpi eq, %3, %13 : vector<16x16xi32>
    %c0_6 = arith.constant 0 : index
    %c0_7 = arith.constant 0 : index
    %15 = vector.load %arg1[%c0_6, %c0_7] : memref<16x2xf32, #tpu.memory_space<vmem>>, vector<16x1xf32>
    %cst = arith.constant 0.000000e+00 : f32
    %16 = vector.shape_cast %15 : vector<16x1xf32> to vector<16x1xf32>
    %17 = vector.broadcast %16 : vector<16x1xf32> to vector<16x16xf32>
    %18 = vector.broadcast %cst : f32 to vector<16x16xf32>
    %19 = arith.select %14, %17, %18 : vector<16x16xi1>, vector<16x16xf32>
    %20 = arith.addf %12, %19 : vector<16x16xf32>
    %c15_i32 = arith.constant 15 : i32
    %21 = vector.broadcast %c15_i32 : i32 to vector<16x16xi32>
    %22 = arith.cmpi eq, %3, %21 : vector<16x16xi32>
    %c0_8 = arith.constant 0 : index
    %c1_9 = arith.constant 1 : index
    %23 = vector.load %arg1[%c0_8, %c1_9] : memref<16x2xf32, #tpu.memory_space<vmem>>, vector<16x1xf32>
    %cst_10 = arith.constant 0.000000e+00 : f32
    %24 = vector.shape_cast %23 : vector<16x1xf32> to vector<16x1xf32>
    %25 = vector.broadcast %24 : vector<16x1xf32> to vector<16x16xf32>
    %26 = vector.broadcast %cst_10 : f32 to vector<16x16xf32>
    %27 = arith.select %22, %25, %26 : vector<16x16xi1>, vector<16x16xf32>
    %28 = arith.addf %20, %27 : vector<16x16xf32>
    %c0_11 = arith.constant 0 : index
    %c0_12 = arith.constant 0 : index
    %29 = vector.load %arg3[%c0_11, %c0_12] : memref<36x384xf32, #tpu.memory_space<vmem>>, vector<16x64xf32>
    %cst_13 = arith.constant dense<0.000000e+00> : vector<16x64xf32>
    %30 = tpu.matmul %28, %29, %cst_13 {dimension_numbers = #tpu.dot_dimension_numbers<[1], [0], [0], [1], [0, 0, 1, 1], [], []>} : vector<16x16xf32>, vector<16x64xf32>, vector<16x64xf32> -> vector<16x64xf32>
    %c16 = arith.constant 16 : index
    %c0_14 = arith.constant 0 : index
    %31 = vector.load %arg3[%c16, %c0_14] : memref<36x384xf32, #tpu.memory_space<vmem>>, vector<1x64xf32>
    %32 = vector.broadcast %31 : vector<1x64xf32> to vector<16x64xf32>
    %33 = arith.addf %30, %32 : vector<16x64xf32>
    %c17 = arith.constant 17 : index
    %c0_15 = arith.constant 0 : index
    %34 = vector.load %arg3[%c17, %c0_15] : memref<36x384xf32, #tpu.memory_space<vmem>>, vector<1x64xf32>
    %c18 = arith.constant 18 : index
    %c0_16 = arith.constant 0 : index
    %35 = vector.load %arg3[%c18, %c0_16] : memref<36x384xf32, #tpu.memory_space<vmem>>, vector<1x64xf32>
    %cst_17 = arith.constant dense<0.000000e+00> : vector<16xf32>
    %36 = vector.multi_reduction <add>, %33, %cst_17 [1] : vector<16x64xf32> to vector<16xf32>
    %37 = vector.shape_cast %36 : vector<16xf32> to vector<16x1xf32>
    %cst_18 = arith.constant 6.400000e+01 : f32
    %38 = vector.broadcast %cst_18 : f32 to vector<16x1xf32>
    %39 = arith.divf %37, %38 : vector<16x1xf32>
    %40 = arith.mulf %33, %33 : vector<16x64xf32>
    %cst_19 = arith.constant dense<0.000000e+00> : vector<16xf32>
    %41 = vector.multi_reduction <add>, %40, %cst_19 [1] : vector<16x64xf32> to vector<16xf32>
    %42 = vector.shape_cast %41 : vector<16xf32> to vector<16x1xf32>
    %cst_20 = arith.constant 6.400000e+01 : f32
    %43 = vector.broadcast %cst_20 : f32 to vector<16x1xf32>
    %44 = arith.divf %42, %43 : vector<16x1xf32>
    %45 = vector.broadcast %39 : vector<16x1xf32> to vector<16x64xf32>
    %46 = arith.subf %33, %45 : vector<16x64xf32>
    %47 = arith.mulf %39, %39 : vector<16x1xf32>
    %48 = arith.subf %44, %47 : vector<16x1xf32>
    %cst_21 = arith.constant 9.99999974E-6 : f32
    %49 = vector.broadcast %cst_21 : f32 to vector<16x1xf32>
    %50 = arith.addf %48, %49 : vector<16x1xf32>
    %51 = math.rsqrt %50 : vector<16x1xf32>
    %52 = vector.broadcast %51 : vector<16x1xf32> to vector<16x64xf32>
    %53 = arith.mulf %46, %52 : vector<16x64xf32>
    %54 = vector.broadcast %34 : vector<1x64xf32> to vector<16x64xf32>
    %55 = arith.mulf %53, %54 : vector<16x64xf32>
    %56 = vector.broadcast %35 : vector<1x64xf32> to vector<16x64xf32>
    %57 = arith.addf %55, %56 : vector<16x64xf32>
    %58 = arith.truncf %57 : vector<16x64xf32> to vector<16x64xbf16>
    %c0_22 = arith.constant 0 : index
    %c0_23 = arith.constant 0 : index
    %59 = vector.load %arg2[%c0_22, %c0_23] : memref<64x2176xbf16, #tpu.memory_space<vmem>>, vector<64x320xbf16>
    %cst_24 = arith.constant dense<0.000000e+00> : vector<16x320xf32>
    %60 = tpu.matmul %58, %59, %cst_24 {dimension_numbers = #tpu.dot_dimension_numbers<[1], [0], [0], [1], [0, 0, 1, 1], [], []>} : vector<16x64xbf16>, vector<64x320xbf16>, vector<16x320xf32> -> vector<16x320xf32>
    %c19 = arith.constant 19 : index
    %c0_25 = arith.constant 0 : index
    %61 = vector.load %arg3[%c19, %c0_25] : memref<36x384xf32, #tpu.memory_space<vmem>>, vector<1x320xf32>
    %62 = vector.broadcast %61 : vector<1x320xf32> to vector<16x320xf32>
    %63 = arith.addf %60, %62 : vector<16x320xf32>
    %64 = vector.extract_strided_slice %63 {offsets = [0, 0], sizes = [16, 64], strides = [1, 1]} : vector<16x320xf32> to vector<16x64xf32>
    %65 = arith.mulf %64, %0 : vector<16x64xf32>
    %66 = vector.extract_strided_slice %63 {offsets = [0, 192], sizes = [16, 64], strides = [1, 1]} : vector<16x320xf32> to vector<16x64xf32>
    %67 = arith.mulf %66, %1 : vector<16x64xf32>
    %68 = arith.addf %65, %67 : vector<16x64xf32>
    %69 = vector.extract_strided_slice %63 {offsets = [0, 64], sizes = [16, 64], strides = [1, 1]} : vector<16x320xf32> to vector<16x64xf32>
    %70 = arith.mulf %69, %0 : vector<16x64xf32>
    %71 = vector.extract_strided_slice %63 {offsets = [0, 256], sizes = [16, 64], strides = [1, 1]} : vector<16x320xf32> to vector<16x64xf32>
    %72 = arith.mulf %71, %1 : vector<16x64xf32>
    %73 = arith.addf %70, %72 : vector<16x64xf32>
    %74 = vector.extract_strided_slice %63 {offsets = [0, 128], sizes = [16, 64], strides = [1, 1]} : vector<16x320xf32> to vector<16x64xf32>
    %75 = arith.truncf %68 : vector<16x64xf32> to vector<16x64xbf16>
    %76 = arith.truncf %73 : vector<16x64xf32> to vector<16x64xbf16>
    %cst_26 = arith.constant dense<0.000000e+00> : vector<16x16xf32>
    %77 = tpu.matmul %75, %76, %cst_26 {dimension_numbers = #tpu.dot_dimension_numbers<[1], [1], [0], [0], [0, 0, 1, 0], [], []>} : vector<16x64xbf16>, vector<16x64xbf16>, vector<16x16xf32> -> vector<16x16xf32>
    %78 = arith.addf %77, %2 : vector<16x16xf32>
    %cst_27 = arith.constant dense<0xFF800000> : vector<16xf32>
    %79 = vector.multi_reduction <maximumf>, %78, %cst_27 [1] : vector<16x16xf32> to vector<16xf32>
    %80 = vector.shape_cast %79 : vector<16xf32> to vector<16x1xf32>
    %81 = vector.broadcast %80 : vector<16x1xf32> to vector<16x16xf32>
    %82 = arith.subf %78, %81 : vector<16x16xf32>
    %83 = math.exp %82 : vector<16x16xf32>
    %cst_28 = arith.constant dense<0.000000e+00> : vector<16xf32>
    %84 = vector.multi_reduction <add>, %83, %cst_28 [1] : vector<16x16xf32> to vector<16xf32>
    %85 = vector.shape_cast %84 : vector<16xf32> to vector<16x1xf32>
    %86 = tpu.reciprocal %85 {approx = true} : vector<16x1xf32> -> vector<16x1xf32>
    %87 = vector.broadcast %86 : vector<16x1xf32> to vector<16x16xf32>
    %88 = arith.mulf %83, %87 : vector<16x16xf32>
    %89 = arith.truncf %88 : vector<16x16xf32> to vector<16x16xbf16>
    %90 = arith.truncf %74 : vector<16x64xf32> to vector<16x64xbf16>
    %cst_29 = arith.constant dense<0.000000e+00> : vector<16x64xf32>
    %91 = tpu.matmul %89, %90, %cst_29 {dimension_numbers = #tpu.dot_dimension_numbers<[1], [0], [0], [1], [0, 0, 1, 1], [], []>} : vector<16x16xbf16>, vector<16x64xbf16>, vector<16x64xf32> -> vector<16x64xf32>
    %92 = arith.truncf %91 : vector<16x64xf32> to vector<16x64xbf16>
    %c0_30 = arith.constant 0 : index
    %c384 = arith.constant 384 : index
    %93 = vector.load %arg2[%c0_30, %c384] : memref<64x2176xbf16, #tpu.memory_space<vmem>>, vector<64x64xbf16>
    %cst_31 = arith.constant dense<0.000000e+00> : vector<16x64xf32>
    %94 = tpu.matmul %92, %93, %cst_31 {dimension_numbers = #tpu.dot_dimension_numbers<[1], [0], [0], [1], [0, 0, 1, 1], [], []>} : vector<16x64xbf16>, vector<64x64xbf16>, vector<16x64xf32> -> vector<16x64xf32>
    %c20 = arith.constant 20 : index
    %c0_32 = arith.constant 0 : index
    %95 = vector.load %arg3[%c20, %c0_32] : memref<36x384xf32, #tpu.memory_space<vmem>>, vector<1x64xf32>
    %96 = vector.broadcast %95 : vector<1x64xf32> to vector<16x64xf32>
    %97 = arith.addf %94, %96 : vector<16x64xf32>
    %98 = arith.addf %33, %97 : vector<16x64xf32>
    %c21 = arith.constant 21 : index
    %c0_33 = arith.constant 0 : index
    %99 = vector.load %arg3[%c21, %c0_33] : memref<36x384xf32, #tpu.memory_space<vmem>>, vector<1x64xf32>
    %c22 = arith.constant 22 : index
    %c0_34 = arith.constant 0 : index
    %100 = vector.load %arg3[%c22, %c0_34] : memref<36x384xf32, #tpu.memory_space<vmem>>, vector<1x64xf32>
    %cst_35 = arith.constant dense<0.000000e+00> : vector<16xf32>
    %101 = vector.multi_reduction <add>, %98, %cst_35 [1] : vector<16x64xf32> to vector<16xf32>
    %102 = vector.shape_cast %101 : vector<16xf32> to vector<16x1xf32>
    %cst_36 = arith.constant 6.400000e+01 : f32
    %103 = vector.broadcast %cst_36 : f32 to vector<16x1xf32>
    %104 = arith.divf %102, %103 : vector<16x1xf32>
    %105 = arith.mulf %98, %98 : vector<16x64xf32>
    %cst_37 = arith.constant dense<0.000000e+00> : vector<16xf32>
    %106 = vector.multi_reduction <add>, %105, %cst_37 [1] : vector<16x64xf32> to vector<16xf32>
    %107 = vector.shape_cast %106 : vector<16xf32> to vector<16x1xf32>
    %cst_38 = arith.constant 6.400000e+01 : f32
    %108 = vector.broadcast %cst_38 : f32 to vector<16x1xf32>
    %109 = arith.divf %107, %108 : vector<16x1xf32>
    %110 = vector.broadcast %104 : vector<16x1xf32> to vector<16x64xf32>
    %111 = arith.subf %98, %110 : vector<16x64xf32>
    %112 = arith.mulf %104, %104 : vector<16x1xf32>
    %113 = arith.subf %109, %112 : vector<16x1xf32>
    %cst_39 = arith.constant 9.99999974E-6 : f32
    %114 = vector.broadcast %cst_39 : f32 to vector<16x1xf32>
    %115 = arith.addf %113, %114 : vector<16x1xf32>
    %116 = math.rsqrt %115 : vector<16x1xf32>
    %117 = vector.broadcast %116 : vector<16x1xf32> to vector<16x64xf32>
    %118 = arith.mulf %111, %117 : vector<16x64xf32>
    %119 = vector.broadcast %99 : vector<1x64xf32> to vector<16x64xf32>
    %120 = arith.mulf %118, %119 : vector<16x64xf32>
    %121 = vector.broadcast %100 : vector<1x64xf32> to vector<16x64xf32>
    %122 = arith.addf %120, %121 : vector<16x64xf32>
    %123 = arith.truncf %122 : vector<16x64xf32> to vector<16x64xbf16>
    %c0_40 = arith.constant 0 : index
    %c512 = arith.constant 512 : index
    %124 = vector.load %arg2[%c0_40, %c512] : memref<64x2176xbf16, #tpu.memory_space<vmem>>, vector<64x256xbf16>
    %cst_41 = arith.constant dense<0.000000e+00> : vector<16x256xf32>
    %125 = tpu.matmul %123, %124, %cst_41 {dimension_numbers = #tpu.dot_dimension_numbers<[1], [0], [0], [1], [0, 0, 1, 1], [], []>} : vector<16x64xbf16>, vector<64x256xbf16>, vector<16x256xf32> -> vector<16x256xf32>
    %c23 = arith.constant 23 : index
    %c0_42 = arith.constant 0 : index
    %126 = vector.load %arg3[%c23, %c0_42] : memref<36x384xf32, #tpu.memory_space<vmem>>, vector<1x256xf32>
    %127 = vector.broadcast %126 : vector<1x256xf32> to vector<16x256xf32>
    %128 = arith.addf %125, %127 : vector<16x256xf32>
    %129 = arith.mulf %128, %128 : vector<16x256xf32>
    %130 = arith.mulf %128, %129 : vector<16x256xf32>
    %cst_43 = arith.constant 4.471500e-02 : f32
    %131 = vector.broadcast %cst_43 : f32 to vector<16x256xf32>
    %132 = arith.mulf %131, %130 : vector<16x256xf32>
    %133 = arith.addf %128, %132 : vector<16x256xf32>
    %cst_44 = arith.constant 0.797884583 : f32
    %134 = vector.broadcast %cst_44 : f32 to vector<16x256xf32>
    %135 = arith.mulf %134, %133 : vector<16x256xf32>
    %136 = math.tanh %135 : vector<16x256xf32>
    %cst_45 = arith.constant 1.000000e+00 : f32
    %137 = vector.broadcast %cst_45 : f32 to vector<16x256xf32>
    %138 = arith.addf %137, %136 : vector<16x256xf32>
    %cst_46 = arith.constant 5.000000e-01 : f32
    %139 = vector.broadcast %cst_46 : f32 to vector<16x256xf32>
    %140 = arith.mulf %139, %138 : vector<16x256xf32>
    %141 = arith.mulf %128, %140 : vector<16x256xf32>
    %142 = arith.truncf %141 : vector<16x256xf32> to vector<16x256xbf16>
    %c0_47 = arith.constant 0 : index
    %c768 = arith.constant 768 : index
    %143 = vector.load %arg2[%c0_47, %c768] : memref<64x2176xbf16, #tpu.memory_space<vmem>>, vector<64x256xbf16>
    %cst_48 = arith.constant dense<0.000000e+00> : vector<16x64xf32>
    %144 = tpu.matmul %142, %143, %cst_48 {dimension_numbers = #tpu.dot_dimension_numbers<[1], [1], [0], [0], [0, 0, 1, 0], [], []>} : vector<16x256xbf16>, vector<64x256xbf16>, vector<16x64xf32> -> vector<16x64xf32>
    %c24 = arith.constant 24 : index
    %c0_49 = arith.constant 0 : index
    %145 = vector.load %arg3[%c24, %c0_49] : memref<36x384xf32, #tpu.memory_space<vmem>>, vector<1x64xf32>
    %146 = vector.broadcast %145 : vector<1x64xf32> to vector<16x64xf32>
    %147 = arith.addf %144, %146 : vector<16x64xf32>
    %148 = arith.addf %98, %147 : vector<16x64xf32>
    %c25 = arith.constant 25 : index
    %c0_50 = arith.constant 0 : index
    %149 = vector.load %arg3[%c25, %c0_50] : memref<36x384xf32, #tpu.memory_space<vmem>>, vector<1x64xf32>
    %c26 = arith.constant 26 : index
    %c0_51 = arith.constant 0 : index
    %150 = vector.load %arg3[%c26, %c0_51] : memref<36x384xf32, #tpu.memory_space<vmem>>, vector<1x64xf32>
    %cst_52 = arith.constant dense<0.000000e+00> : vector<16xf32>
    %151 = vector.multi_reduction <add>, %148, %cst_52 [1] : vector<16x64xf32> to vector<16xf32>
    %152 = vector.shape_cast %151 : vector<16xf32> to vector<16x1xf32>
    %cst_53 = arith.constant 6.400000e+01 : f32
    %153 = vector.broadcast %cst_53 : f32 to vector<16x1xf32>
    %154 = arith.divf %152, %153 : vector<16x1xf32>
    %155 = arith.mulf %148, %148 : vector<16x64xf32>
    %cst_54 = arith.constant dense<0.000000e+00> : vector<16xf32>
    %156 = vector.multi_reduction <add>, %155, %cst_54 [1] : vector<16x64xf32> to vector<16xf32>
    %157 = vector.shape_cast %156 : vector<16xf32> to vector<16x1xf32>
    %cst_55 = arith.constant 6.400000e+01 : f32
    %158 = vector.broadcast %cst_55 : f32 to vector<16x1xf32>
    %159 = arith.divf %157, %158 : vector<16x1xf32>
    %160 = vector.broadcast %154 : vector<16x1xf32> to vector<16x64xf32>
    %161 = arith.subf %148, %160 : vector<16x64xf32>
    %162 = arith.mulf %154, %154 : vector<16x1xf32>
    %163 = arith.subf %159, %162 : vector<16x1xf32>
    %cst_56 = arith.constant 9.99999974E-6 : f32
    %164 = vector.broadcast %cst_56 : f32 to vector<16x1xf32>
    %165 = arith.addf %163, %164 : vector<16x1xf32>
    %166 = math.rsqrt %165 : vector<16x1xf32>
    %167 = vector.broadcast %166 : vector<16x1xf32> to vector<16x64xf32>
    %168 = arith.mulf %161, %167 : vector<16x64xf32>
    %169 = vector.broadcast %149 : vector<1x64xf32> to vector<16x64xf32>
    %170 = arith.mulf %168, %169 : vector<16x64xf32>
    %171 = vector.broadcast %150 : vector<1x64xf32> to vector<16x64xf32>
    %172 = arith.addf %170, %171 : vector<16x64xf32>
    %173 = arith.truncf %172 : vector<16x64xf32> to vector<16x64xbf16>
    %c0_57 = arith.constant 0 : index
    %c1024 = arith.constant 1024 : index
    %174 = vector.load %arg2[%c0_57, %c1024] : memref<64x2176xbf16, #tpu.memory_space<vmem>>, vector<64x320xbf16>
    %cst_58 = arith.constant dense<0.000000e+00> : vector<16x320xf32>
    %175 = tpu.matmul %173, %174, %cst_58 {dimension_numbers = #tpu.dot_dimension_numbers<[1], [0], [0], [1], [0, 0, 1, 1], [], []>} : vector<16x64xbf16>, vector<64x320xbf16>, vector<16x320xf32> -> vector<16x320xf32>
    %c27 = arith.constant 27 : index
    %c0_59 = arith.constant 0 : index
    %176 = vector.load %arg3[%c27, %c0_59] : memref<36x384xf32, #tpu.memory_space<vmem>>, vector<1x320xf32>
    %177 = vector.broadcast %176 : vector<1x320xf32> to vector<16x320xf32>
    %178 = arith.addf %175, %177 : vector<16x320xf32>
    %179 = vector.extract_strided_slice %178 {offsets = [0, 0], sizes = [16, 64], strides = [1, 1]} : vector<16x320xf32> to vector<16x64xf32>
    %180 = arith.mulf %179, %0 : vector<16x64xf32>
    %181 = vector.extract_strided_slice %178 {offsets = [0, 192], sizes = [16, 64], strides = [1, 1]} : vector<16x320xf32> to vector<16x64xf32>
    %182 = arith.mulf %181, %1 : vector<16x64xf32>
    %183 = arith.addf %180, %182 : vector<16x64xf32>
    %184 = vector.extract_strided_slice %178 {offsets = [0, 64], sizes = [16, 64], strides = [1, 1]} : vector<16x320xf32> to vector<16x64xf32>
    %185 = arith.mulf %184, %0 : vector<16x64xf32>
    %186 = vector.extract_strided_slice %178 {offsets = [0, 256], sizes = [16, 64], strides = [1, 1]} : vector<16x320xf32> to vector<16x64xf32>
    %187 = arith.mulf %186, %1 : vector<16x64xf32>
    %188 = arith.addf %185, %187 : vector<16x64xf32>
    %189 = vector.extract_strided_slice %178 {offsets = [0, 128], sizes = [16, 64], strides = [1, 1]} : vector<16x320xf32> to vector<16x64xf32>
    %190 = arith.truncf %183 : vector<16x64xf32> to vector<16x64xbf16>
    %191 = arith.truncf %188 : vector<16x64xf32> to vector<16x64xbf16>
    %cst_60 = arith.constant dense<0.000000e+00> : vector<16x16xf32>
    %192 = tpu.matmul %190, %191, %cst_60 {dimension_numbers = #tpu.dot_dimension_numbers<[1], [1], [0], [0], [0, 0, 1, 0], [], []>} : vector<16x64xbf16>, vector<16x64xbf16>, vector<16x16xf32> -> vector<16x16xf32>
    %193 = arith.addf %192, %2 : vector<16x16xf32>
    %cst_61 = arith.constant dense<0xFF800000> : vector<16xf32>
    %194 = vector.multi_reduction <maximumf>, %193, %cst_61 [1] : vector<16x16xf32> to vector<16xf32>
    %195 = vector.shape_cast %194 : vector<16xf32> to vector<16x1xf32>
    %196 = vector.broadcast %195 : vector<16x1xf32> to vector<16x16xf32>
    %197 = arith.subf %193, %196 : vector<16x16xf32>
    %198 = math.exp %197 : vector<16x16xf32>
    %cst_62 = arith.constant dense<0.000000e+00> : vector<16xf32>
    %199 = vector.multi_reduction <add>, %198, %cst_62 [1] : vector<16x16xf32> to vector<16xf32>
    %200 = vector.shape_cast %199 : vector<16xf32> to vector<16x1xf32>
    %201 = tpu.reciprocal %200 {approx = true} : vector<16x1xf32> -> vector<16x1xf32>
    %202 = vector.broadcast %201 : vector<16x1xf32> to vector<16x16xf32>
    %203 = arith.mulf %198, %202 : vector<16x16xf32>
    %204 = arith.truncf %203 : vector<16x16xf32> to vector<16x16xbf16>
    %205 = arith.truncf %189 : vector<16x64xf32> to vector<16x64xbf16>
    %cst_63 = arith.constant dense<0.000000e+00> : vector<16x64xf32>
    %206 = tpu.matmul %204, %205, %cst_63 {dimension_numbers = #tpu.dot_dimension_numbers<[1], [0], [0], [1], [0, 0, 1, 1], [], []>} : vector<16x16xbf16>, vector<16x64xbf16>, vector<16x64xf32> -> vector<16x64xf32>
    %207 = arith.truncf %206 : vector<16x64xf32> to vector<16x64xbf16>
    %c0_64 = arith.constant 0 : index
    %c1408 = arith.constant 1408 : index
    %208 = vector.load %arg2[%c0_64, %c1408] : memref<64x2176xbf16, #tpu.memory_space<vmem>>, vector<64x64xbf16>
    %cst_65 = arith.constant dense<0.000000e+00> : vector<16x64xf32>
    %209 = tpu.matmul %207, %208, %cst_65 {dimension_numbers = #tpu.dot_dimension_numbers<[1], [0], [0], [1], [0, 0, 1, 1], [], []>} : vector<16x64xbf16>, vector<64x64xbf16>, vector<16x64xf32> -> vector<16x64xf32>
    %c28 = arith.constant 28 : index
    %c0_66 = arith.constant 0 : index
    %210 = vector.load %arg3[%c28, %c0_66] : memref<36x384xf32, #tpu.memory_space<vmem>>, vector<1x64xf32>
    %211 = vector.broadcast %210 : vector<1x64xf32> to vector<16x64xf32>
    %212 = arith.addf %209, %211 : vector<16x64xf32>
    %213 = arith.addf %148, %212 : vector<16x64xf32>
    %c29 = arith.constant 29 : index
    %c0_67 = arith.constant 0 : index
    %214 = vector.load %arg3[%c29, %c0_67] : memref<36x384xf32, #tpu.memory_space<vmem>>, vector<1x64xf32>
    %c30 = arith.constant 30 : index
    %c0_68 = arith.constant 0 : index
    %215 = vector.load %arg3[%c30, %c0_68] : memref<36x384xf32, #tpu.memory_space<vmem>>, vector<1x64xf32>
    %cst_69 = arith.constant dense<0.000000e+00> : vector<16xf32>
    %216 = vector.multi_reduction <add>, %213, %cst_69 [1] : vector<16x64xf32> to vector<16xf32>
    %217 = vector.shape_cast %216 : vector<16xf32> to vector<16x1xf32>
    %cst_70 = arith.constant 6.400000e+01 : f32
    %218 = vector.broadcast %cst_70 : f32 to vector<16x1xf32>
    %219 = arith.divf %217, %218 : vector<16x1xf32>
    %220 = arith.mulf %213, %213 : vector<16x64xf32>
    %cst_71 = arith.constant dense<0.000000e+00> : vector<16xf32>
    %221 = vector.multi_reduction <add>, %220, %cst_71 [1] : vector<16x64xf32> to vector<16xf32>
    %222 = vector.shape_cast %221 : vector<16xf32> to vector<16x1xf32>
    %cst_72 = arith.constant 6.400000e+01 : f32
    %223 = vector.broadcast %cst_72 : f32 to vector<16x1xf32>
    %224 = arith.divf %222, %223 : vector<16x1xf32>
    %225 = vector.broadcast %219 : vector<16x1xf32> to vector<16x64xf32>
    %226 = arith.subf %213, %225 : vector<16x64xf32>
    %227 = arith.mulf %219, %219 : vector<16x1xf32>
    %228 = arith.subf %224, %227 : vector<16x1xf32>
    %cst_73 = arith.constant 9.99999974E-6 : f32
    %229 = vector.broadcast %cst_73 : f32 to vector<16x1xf32>
    %230 = arith.addf %228, %229 : vector<16x1xf32>
    %231 = math.rsqrt %230 : vector<16x1xf32>
    %232 = vector.broadcast %231 : vector<16x1xf32> to vector<16x64xf32>
    %233 = arith.mulf %226, %232 : vector<16x64xf32>
    %234 = vector.broadcast %214 : vector<1x64xf32> to vector<16x64xf32>
    %235 = arith.mulf %233, %234 : vector<16x64xf32>
    %236 = vector.broadcast %215 : vector<1x64xf32> to vector<16x64xf32>
    %237 = arith.addf %235, %236 : vector<16x64xf32>
    %238 = arith.truncf %237 : vector<16x64xf32> to vector<16x64xbf16>
    %c0_74 = arith.constant 0 : index
    %c1536 = arith.constant 1536 : index
    %239 = vector.load %arg2[%c0_74, %c1536] : memref<64x2176xbf16, #tpu.memory_space<vmem>>, vector<64x256xbf16>
    %cst_75 = arith.constant dense<0.000000e+00> : vector<16x256xf32>
    %240 = tpu.matmul %238, %239, %cst_75 {dimension_numbers = #tpu.dot_dimension_numbers<[1], [0], [0], [1], [0, 0, 1, 1], [], []>} : vector<16x64xbf16>, vector<64x256xbf16>, vector<16x256xf32> -> vector<16x256xf32>
    %c31 = arith.constant 31 : index
    %c0_76 = arith.constant 0 : index
    %241 = vector.load %arg3[%c31, %c0_76] : memref<36x384xf32, #tpu.memory_space<vmem>>, vector<1x256xf32>
    %242 = vector.broadcast %241 : vector<1x256xf32> to vector<16x256xf32>
    %243 = arith.addf %240, %242 : vector<16x256xf32>
    %244 = arith.mulf %243, %243 : vector<16x256xf32>
    %245 = arith.mulf %243, %244 : vector<16x256xf32>
    %cst_77 = arith.constant 4.471500e-02 : f32
    %246 = vector.broadcast %cst_77 : f32 to vector<16x256xf32>
    %247 = arith.mulf %246, %245 : vector<16x256xf32>
    %248 = arith.addf %243, %247 : vector<16x256xf32>
    %cst_78 = arith.constant 0.797884583 : f32
    %249 = vector.broadcast %cst_78 : f32 to vector<16x256xf32>
    %250 = arith.mulf %249, %248 : vector<16x256xf32>
    %251 = math.tanh %250 : vector<16x256xf32>
    %cst_79 = arith.constant 1.000000e+00 : f32
    %252 = vector.broadcast %cst_79 : f32 to vector<16x256xf32>
    %253 = arith.addf %252, %251 : vector<16x256xf32>
    %cst_80 = arith.constant 5.000000e-01 : f32
    %254 = vector.broadcast %cst_80 : f32 to vector<16x256xf32>
    %255 = arith.mulf %254, %253 : vector<16x256xf32>
    %256 = arith.mulf %243, %255 : vector<16x256xf32>
    %257 = arith.truncf %256 : vector<16x256xf32> to vector<16x256xbf16>
    %c0_81 = arith.constant 0 : index
    %c1792 = arith.constant 1792 : index
    %258 = vector.load %arg2[%c0_81, %c1792] : memref<64x2176xbf16, #tpu.memory_space<vmem>>, vector<64x256xbf16>
    %cst_82 = arith.constant dense<0.000000e+00> : vector<16x64xf32>
    %259 = tpu.matmul %257, %258, %cst_82 {dimension_numbers = #tpu.dot_dimension_numbers<[1], [1], [0], [0], [0, 0, 1, 0], [], []>} : vector<16x256xbf16>, vector<64x256xbf16>, vector<16x64xf32> -> vector<16x64xf32>
    %c32 = arith.constant 32 : index
    %c0_83 = arith.constant 0 : index
    %260 = vector.load %arg3[%c32, %c0_83] : memref<36x384xf32, #tpu.memory_space<vmem>>, vector<1x64xf32>
    %261 = vector.broadcast %260 : vector<1x64xf32> to vector<16x64xf32>
    %262 = arith.addf %259, %261 : vector<16x64xf32>
    %263 = arith.addf %213, %262 : vector<16x64xf32>
    %c33 = arith.constant 33 : index
    %c0_84 = arith.constant 0 : index
    %264 = vector.load %arg3[%c33, %c0_84] : memref<36x384xf32, #tpu.memory_space<vmem>>, vector<1x64xf32>
    %c34 = arith.constant 34 : index
    %c0_85 = arith.constant 0 : index
    %265 = vector.load %arg3[%c34, %c0_85] : memref<36x384xf32, #tpu.memory_space<vmem>>, vector<1x64xf32>
    %cst_86 = arith.constant dense<0.000000e+00> : vector<16xf32>
    %266 = vector.multi_reduction <add>, %263, %cst_86 [1] : vector<16x64xf32> to vector<16xf32>
    %267 = vector.shape_cast %266 : vector<16xf32> to vector<16x1xf32>
    %cst_87 = arith.constant 6.400000e+01 : f32
    %268 = vector.broadcast %cst_87 : f32 to vector<16x1xf32>
    %269 = arith.divf %267, %268 : vector<16x1xf32>
    %270 = arith.mulf %263, %263 : vector<16x64xf32>
    %cst_88 = arith.constant dense<0.000000e+00> : vector<16xf32>
    %271 = vector.multi_reduction <add>, %270, %cst_88 [1] : vector<16x64xf32> to vector<16xf32>
    %272 = vector.shape_cast %271 : vector<16xf32> to vector<16x1xf32>
    %cst_89 = arith.constant 6.400000e+01 : f32
    %273 = vector.broadcast %cst_89 : f32 to vector<16x1xf32>
    %274 = arith.divf %272, %273 : vector<16x1xf32>
    %275 = vector.broadcast %269 : vector<16x1xf32> to vector<16x64xf32>
    %276 = arith.subf %263, %275 : vector<16x64xf32>
    %277 = arith.mulf %269, %269 : vector<16x1xf32>
    %278 = arith.subf %274, %277 : vector<16x1xf32>
    %cst_90 = arith.constant 9.99999974E-6 : f32
    %279 = vector.broadcast %cst_90 : f32 to vector<16x1xf32>
    %280 = arith.addf %278, %279 : vector<16x1xf32>
    %281 = math.rsqrt %280 : vector<16x1xf32>
    %282 = vector.broadcast %281 : vector<16x1xf32> to vector<16x64xf32>
    %283 = arith.mulf %276, %282 : vector<16x64xf32>
    %284 = vector.broadcast %264 : vector<1x64xf32> to vector<16x64xf32>
    %285 = arith.mulf %283, %284 : vector<16x64xf32>
    %286 = vector.broadcast %265 : vector<1x64xf32> to vector<16x64xf32>
    %287 = arith.addf %285, %286 : vector<16x64xf32>
    %288 = arith.truncf %287 : vector<16x64xf32> to vector<16x64xbf16>
    %c0_91 = arith.constant 0 : index
    %c2048 = arith.constant 2048 : index
    %289 = vector.load %arg2[%c0_91, %c2048] : memref<64x2176xbf16, #tpu.memory_space<vmem>>, vector<64x128xbf16>
    %cst_92 = arith.constant dense<0.000000e+00> : vector<16x128xf32>
    %290 = tpu.matmul %288, %289, %cst_92 {dimension_numbers = #tpu.dot_dimension_numbers<[1], [0], [0], [1], [0, 0, 1, 1], [], []>} : vector<16x64xbf16>, vector<64x128xbf16>, vector<16x128xf32> -> vector<16x128xf32>
    %c35 = arith.constant 35 : index
    %c0_93 = arith.constant 0 : index
    %291 = vector.load %arg3[%c35, %c0_93] : memref<36x384xf32, #tpu.memory_space<vmem>>, vector<1x128xf32>
    %292 = vector.broadcast %291 : vector<1x128xf32> to vector<16x128xf32>
    %293 = arith.addf %290, %292 : vector<16x128xf32>
    %294 = tpu.iota {dimensions = array<i32: 1>} : vector<16x128xi32>
    %295 = arith.sitofp %294 : vector<16x128xi32> to vector<16x128xf32>
    %c8_i32 = arith.constant 8 : i32
    %296 = vector.broadcast %c8_i32 : i32 to vector<16x128xi32>
    %297 = arith.cmpi sge, %294, %296 : vector<16x128xi32>
    %c14_i32_94 = arith.constant 14 : i32
    %298 = vector.broadcast %c14_i32_94 : i32 to vector<16x128xi32>
    %299 = arith.cmpi slt, %294, %298 : vector<16x128xi32>
    %300 = arith.andi %297, %299 : vector<16x128xi1>
    %cst_95 = arith.constant 0xFF800000 : f32
    %301 = vector.broadcast %cst_95 : f32 to vector<16x128xf32>
    %302 = arith.select %300, %293, %301 : vector<16x128xi1>, vector<16x128xf32>
    %cst_96 = arith.constant dense<0xFF800000> : vector<16xf32>
    %303 = vector.multi_reduction <maximumf>, %302, %cst_96 [1] : vector<16x128xf32> to vector<16xf32>
    %304 = vector.shape_cast %303 : vector<16xf32> to vector<16x1xf32>
    %305 = vector.broadcast %304 : vector<16x1xf32> to vector<16x128xf32>
    %306 = arith.cmpf oeq, %302, %305 : vector<16x128xf32>
    %307 = arith.andi %300, %306 : vector<16x128xi1>
    %cst_97 = arith.constant 1.400000e+01 : f32
    %308 = vector.broadcast %cst_97 : f32 to vector<16x128xf32>
    %309 = arith.select %307, %295, %308 : vector<16x128xi1>, vector<16x128xf32>
    %cst_98 = arith.constant dense<0x7F800000> : vector<16xf32>
    %310 = vector.multi_reduction <minimumf>, %309, %cst_98 [1] : vector<16x128xf32> to vector<16xf32>
    %311 = vector.shape_cast %310 : vector<16xf32> to vector<16x1xf32>
    %c0_i32 = arith.constant 0 : i32
    %312 = vector.broadcast %c0_i32 : i32 to vector<16x128xi32>
    %313 = arith.cmpi eq, %294, %312 : vector<16x128xi32>
    %cst_99 = arith.constant 9.000000e+00 : f32
    %314 = vector.broadcast %cst_99 : f32 to vector<16x1xf32>
    %315 = arith.subf %311, %314 : vector<16x1xf32>
    %316 = vector.shape_cast %315 : vector<16x1xf32> to vector<16x1xf32>
    %317 = vector.broadcast %316 : vector<16x1xf32> to vector<16x128xf32>
    %318 = arith.select %313, %317, %293 : vector<16x128xi1>, vector<16x128xf32>
    %c14_i32_100 = arith.constant 14 : i32
    %319 = vector.broadcast %c14_i32_100 : i32 to vector<16x128xi32>
    %320 = arith.cmpi sge, %294, %319 : vector<16x128xi32>
    %c22_i32 = arith.constant 22 : i32
    %321 = vector.broadcast %c22_i32 : i32 to vector<16x128xi32>
    %322 = arith.cmpi slt, %294, %321 : vector<16x128xi32>
    %323 = arith.andi %320, %322 : vector<16x128xi1>
    %cst_101 = arith.constant 0xFF800000 : f32
    %324 = vector.broadcast %cst_101 : f32 to vector<16x128xf32>
    %325 = arith.select %323, %293, %324 : vector<16x128xi1>, vector<16x128xf32>
    %cst_102 = arith.constant dense<0xFF800000> : vector<16xf32>
    %326 = vector.multi_reduction <maximumf>, %325, %cst_102 [1] : vector<16x128xf32> to vector<16xf32>
    %327 = vector.shape_cast %326 : vector<16xf32> to vector<16x1xf32>
    %328 = vector.broadcast %327 : vector<16x1xf32> to vector<16x128xf32>
    %329 = arith.cmpf oeq, %325, %328 : vector<16x128xf32>
    %330 = arith.andi %323, %329 : vector<16x128xi1>
    %cst_103 = arith.constant 2.200000e+01 : f32
    %331 = vector.broadcast %cst_103 : f32 to vector<16x128xf32>
    %332 = arith.select %330, %295, %331 : vector<16x128xi1>, vector<16x128xf32>
    %cst_104 = arith.constant dense<0x7F800000> : vector<16xf32>
    %333 = vector.multi_reduction <minimumf>, %332, %cst_104 [1] : vector<16x128xf32> to vector<16xf32>
    %334 = vector.shape_cast %333 : vector<16xf32> to vector<16x1xf32>
    %c1_i32 = arith.constant 1 : i32
    %335 = vector.broadcast %c1_i32 : i32 to vector<16x128xi32>
    %336 = arith.cmpi eq, %294, %335 : vector<16x128xi32>
    %cst_105 = arith.constant 1.500000e+01 : f32
    %337 = vector.broadcast %cst_105 : f32 to vector<16x1xf32>
    %338 = arith.subf %334, %337 : vector<16x1xf32>
    %339 = vector.shape_cast %338 : vector<16x1xf32> to vector<16x1xf32>
    %340 = vector.broadcast %339 : vector<16x1xf32> to vector<16x128xf32>
    %341 = arith.select %336, %340, %318 : vector<16x128xi1>, vector<16x128xf32>
    %c0_106 = arith.constant 0 : index
    %c0_107 = arith.constant 0 : index
    %342 = vector.load %arg5[%c0_106, %c0_107] : memref<16x128xf32, #tpu.memory_space<vmem>>, vector<16x128xf32>
    tpu.vector_store %arg5[%c0_106, %c0_107], %341 {strides = array<i32>} : memref<16x128xf32, #tpu.memory_space<vmem>>, vector<16x128xf32>,
    return
  }
}

</mosaic_0001>

<llo_original>
// kernel: transformer_forward.1
$region0: #{transformer_forward.1}
  #allocation0 [shape = 'u32[]', space=smem, size = 0x4, offset = 0x4, fixed_abs, tag = 'smem constant byte address 0x4 - core index']
  #allocation1 [shape = 'u32[72,128]{1,0:T(1,128)}', space=vmem, size = 0x9000, scoped, tag = 'internal scratch']
  %s0 = inlined_call_operand.vmem [shape: s32[16,2], index: 0, kind: input, shape index: {}]
  %s1 = inlined_call_operand.vmem [shape: f32[16,2], index: 1, kind: input, shape index: {}]
  %s2 = inlined_call_operand.hbm [shape: bf16[64,2176], index: 2, kind: input, shape index: {}]
  %s3 = inlined_call_operand.hbm [shape: f32[36,384], index: 3, kind: input, shape index: {}]
  %s4 = inlined_call_operand.vmem [shape: f32[16,144], index: 4, kind: input, shape index: {}]
  %s5 = inlined_call_operand.vmem [shape: f32[16,128], index: 5, kind: output, shape index: {}]
  %s6 = sld [smem:[#allocation0]]
  $region38: #{transformer_forward.1} parent=0
    _
  %s8 = ssub.s32 1, %s6
  %s9 = scalar_select 0, %s8, %s6
  $region1: #{transformer_forward.1} parent=0
    #allocation2 [shape = 'u8[278528]{0}', space=vmem, size = 0x44000, scoped, tag = 'input window, operand 2, single buffered']
    #allocation3 [shape = 's32[1]{0}', space=sflag, size = 0x4, scoped, tag = 'scoped memory for transformer_forward.1']
    #allocation4 [shape = 'u8[61440]{0}', space=vmem, size = 0xf000, scoped, tag = 'input window, operand 3, single buffered']
    #allocation5 [shape = 's32[1]{0}', space=sflag, size = 0x4, scoped, tag = 'scoped memory for transformer_forward.1']
    %10 = vsyncpa [#allocation3], 0
    %11 = vsyncpa [#allocation5], 0
    // Predicated region
    $region2: #{transformer_forward.1} parent=1 // pred_check
      _
    $region3: #{transformer_forward.1} parent=1 // pred_check_branch
      %13 = sbr.rel (0) target = $region5
    $region4: #{transformer_forward.1} parent=1 // pred_region
      _
    $region5: #{transformer_forward.1} parent=1 // pred_fallthru
      _
    // Predicated region
    $region6: #{transformer_forward.1} parent=1 // pred_check
      _
    $region7: #{transformer_forward.1} parent=1 // pred_check_branch
      %15 = sbr.rel (0) target = $region9
    $region8: #{transformer_forward.1} parent=1 // pred_region
      _
    $region9: #{transformer_forward.1} parent=1 // pred_fallthru
      _
    // Predicated region
    $region10: #{transformer_forward.1} parent=1 // pred_check
      _
    $region11: #{transformer_forward.1} parent=1 // pred_check_branch
      %17 = sbr.rel (0) target = $region13
    $region12: #{transformer_forward.1} parent=1 // pred_region
      %19 = vsyncadd [#allocation3], 0
      %s20 = sshll.u32 %s2, 4
      %s21 = int_to_ptr.hbm [resolvable:$true] %s20
      %s22 = sshll.u32 [#allocation2], 4
      %s23 = int_to_ptr.vmem [resolvable:$true] %s22
      %28 = dma.hbm_to_vmem [thread:$0]  %s21, 8704, %s23, [#allocation3], 1088, 1088, 68
    $region13: #{transformer_forward.1} parent=1 // pred_fallthru
      _
    // Predicated region
    $region14: #{transformer_forward.1} parent=1 // pred_check
      _
    $region15: #{transformer_forward.1} parent=1 // pred_check_branch
      %30 = sbr.rel (0) target = $region17
    $region16: #{transformer_forward.1} parent=1 // pred_region
      %32 = vsyncadd [#allocation5], 0
      %s33 = sshll.u32 %s3, 4
      %s34 = int_to_ptr.hbm [resolvable:$true] %s33
      %s35 = sshll.u32 [#allocation4], 4
      %s36 = int_to_ptr.vmem [resolvable:$true] %s35
      %41 = dma.hbm_to_vmem [thread:$0]  %s34, 1920, %s36, [#allocation5], 384, 384, 24
    $region17: #{transformer_forward.1} parent=1 // pred_fallthru
      _
    // Predicated region
    $region18: #{transformer_forward.1} parent=1 // pred_check
      _
    $region19: #{transformer_forward.1} parent=1 // pred_check_branch
      %43 = sbr.rel (0) target = $region21
    $region20: #{transformer_forward.1} parent=1 // pred_region
      _
    $region21: #{transformer_forward.1} parent=1 // pred_fallthru
      _
    // Predicated region
    $region22: #{transformer_forward.1} parent=1 // pred_check
      _
    $region23: #{transformer_forward.1} parent=1 // pred_check_branch
      %45 = sbr.rel (0) target = $region25
    $region24: #{transformer_forward.1} parent=1 // pred_region
      %47 = dma.done [#allocation3], 8704
    $region25: #{transformer_forward.1} parent=1 // pred_fallthru
      _
    // Predicated region
    $region26: #{transformer_forward.1} parent=1 // pred_check
      _
    $region27: #{transformer_forward.1} parent=1 // pred_check_branch
      %49 = sbr.rel (0) target = $region29
    $region28: #{transformer_forward.1} parent=1 // pred_region
      %51 = dma.done [#allocation5], 1920
    $region29: #{transformer_forward.1} parent=1 // pred_fallthru
      _
    %v53 = vld [vmem:[%s4] sm:$0xff]
    %v54 = vld [vmem:[%s4 + $0x10] sm:$0xff]
    %v55 = vld [vmem:[%s4 + $0x8] sm:$0xff]
    %v56 = vld [vmem:[%s4 + $0x18] sm:$0xff]
    %v57 = vlaneseq
    %v58 = vand.u32 %v57, 127
    %v59 = vld [vmem:[%s0] sm:$0xff]
    %v60 = vld [vmem:[%s0 + $0x8] sm:$0xff]
    %61 = vset.pattern.permute.xlu0 0
    %62 = vperm.xlu0 %61, %v59
    %v63 = vpop.permute.xlu0 %62
    %64 = vset.pattern.permute.xlu0 0
    %65 = vperm.xlu0 %64, %v60
    %v66 = vpop.permute.xlu0 %65
    %vm67 = vcmp.eq.s32.totalorder %v58, %v63
    %vm68 = vcmp.eq.s32.totalorder %v58, %v66
    %69 = vset.pattern.permute.xlu0 1
    %70 = vperm.xlu0 %69, %v59
    %v71 = vpop.permute.xlu0 %70
    %72 = vset.pattern.permute.xlu0 1
    %73 = vperm.xlu0 %72, %v60
    %v74 = vpop.permute.xlu0 %73
    %vm75 = vcmp.eq.s32.totalorder %v58, %v71
    %vm76 = vcmp.eq.s32.totalorder %v58, %v74
    %vm77 = vmor %vm67, %vm75
    %vm78 = vmor %vm68, %vm76
    %v79 = vsel %vm77, 1, 0
    %v80 = vsel %vm78, 1, 0
    %v81 = vcvt.s32.f32 %v79
    %v82 = vcvt.s32.f32 %v80
    %vm83 = vcmp.eq.s32.totalorder %v58, 14
    %v84 = vld [vmem:[%s1] sm:$0xff]
    %v85 = vld [vmem:[%s1 + $0x8] sm:$0xff]
    %87 = vset.pattern.permute.xlu0 0
    %88 = vperm.xlu0 %87, %v84
    %v89 = vpop.permute.xlu0 %88
    %92 = vset.pattern.permute.xlu0 0
    %93 = vperm.xlu0 %92, %v85
    %v94 = vpop.permute.xlu0 %93
    %v96 = vsel %vm83, %v89, 0.0
    %v97 = vsel %vm83, %v94, 0.0
    %v98 = vadd.f32 %v81, %v96
    %v99 = vadd.f32 %v82, %v97
    %vm100 = vcmp.eq.s32.totalorder %v58, 15
    %101 = vset.pattern.permute.xlu0 1
    %102 = vperm.xlu0 %101, %v84
    %v103 = vpop.permute.xlu0 %102
    %105 = vset.pattern.permute.xlu0 1
    %106 = vperm.xlu0 %105, %v85
    %v107 = vpop.permute.xlu0 %106
    %v109 = vsel %vm100, %v103, 0.0
    %v110 = vsel %vm100, %v107, 0.0
    %v111 = vadd.f32 %v98, %v109
    %v112 = vadd.f32 %v99, %v110
    %v113 = vld [vmem:[#allocation4] sm:$0xff]
    %v114 = vld [vmem:[#allocation4 + $0x18] sm:$0xff]
    %v115 = vld [vmem:[#allocation4 + $0x30] ss:$0 sm:$0xff]
    %vm116 = vcmask 130048
    %v118 = vsel %vm116, %v111, 0
    %v121 = vsel %vm116, %v112, 0
    %123 = vmatpush.msra.mxu0 0.0
    %124 = vmatpush.msra.mxu0 0.0
    %125 = vmatpush.msra.mxu0 0.0
    %126 = vmatpush.msra.mxu0 0.0
    %127 = vmatpush.msra.mxu0 0.0
    %128 = vmatpush.msra.mxu0 0.0
    %129 = vmatpush.msra.mxu0 0.0
    %130 = vmatpush.msra.mxu0 0.0
    %131 = vmatpush.msra.mxu0 0.0
    %132 = vmatpush.msra.mxu0 0.0
    %133 = vmatpush.msra.mxu0 0.0
    %134 = vmatpush.msra.mxu0 0.0
    %135 = vmatpush.msra.mxu0 0.0
    %136 = vmatpush.msra.mxu0 0.0
    %137 = vmatpush.msra.mxu0 %v114
    %138 = vmatpush.msra.mxu0 %v113
    %139 = vmatmul.f32.gmra.mxu0 %v118
    %v140 = vpop.f32.mrf.mxu0
    %v141 = vadd.f32 %v115, %v140
    %142 = vmatmul.f32.gmra.mxu0 %v121
    %v143 = vpop.f32.mrf.mxu0
    %v144 = vadd.f32 %v115, %v143
    %145 = vdwg.mxu0
    %v146 = vld [vmem:[#allocation4 + $0x31] ss:$0 sm:$0xff]
    %v147 = vld [vmem:[#allocation4 + $0x32] ss:$0 sm:$0xff]
    %vm148 = vcmask 523264
    %v149 = vsel %vm148, %v141, 0.0
    %150 = vadd.xlane.f32.xlu0 %v149
    %v151 = vpop.xlane.xlu0 %150
    %v152 = vsel %vm148, %v144, 0.0
    %153 = vadd.xlane.f32.xlu0 %v152
    %v154 = vpop.xlane.xlu0 %153
    %v155 = vrcp.pop 64.0
    %v156 = vmul.f32 64.0, %v155
    %v157 = vsub.f32 1.0, %v156
    %v158 = vmul.f32 %v155, %v157
    %v159 = vadd.f32 %v155, %v158
    %vm160 = vweird.f32 %v155
    %v161 = vsel %vm160, %v155, %v159
    %v162 = vmul.f32 %v151, %v161
    %v163 = vmul.f32 %v154, %v161
    %v164 = vmul.f32 %v141, %v141
    %v165 = vmul.f32 %v144, %v144
    %v166 = vsel %vm148, %v164, 0.0
    %167 = vadd.xlane.f32.xlu0 %v166
    %v168 = vpop.xlane.xlu0 %167
    %v169 = vsel %vm148, %v165, 0.0
    %170 = vadd.xlane.f32.xlu0 %v169
    %v171 = vpop.xlane.xlu0 %170
    %v172 = vmul.f32 %v168, %v161
    %v173 = vmul.f32 %v171, %v161
    %v174 = vsub.f32 %v141, %v162
    %v175 = vsub.f32 %v144, %v163
    %v176 = vmul.f32 %v162, %v162
    %v177 = vmul.f32 %v163, %v163
    %v178 = vsub.f32 %v172, %v176
    %v179 = vsub.f32 %v173, %v177
    %v180 = vadd.f32 %v178, 1e-05
    %v181 = vadd.f32 %v179, 1e-05
    %v182 = vrsqrt.pop %v180
    %v183 = vmul.f32 %v182, %v180
    %v184 = vmul.f32 %v183, %v182
    %v185 = vmul.f32 0.5, %v184
    %v186 = vsub.f32 1.5, %v185
    %v187 = vmul.f32 %v182, %v186
    %vm188 = vweird.f32 %v180
    %vm189 = vweird.f32 %v182
    %vm190 = vmor %vm188, %vm189
    %v191 = vsel %vm190, %v182, %v187
    %v192 = vrsqrt.pop %v181
    %v193 = vmul.f32 %v192, %v181
    %v194 = vmul.f32 %v193, %v192
    %v195 = vmul.f32 0.5, %v194
    %v196 = vsub.f32 1.5, %v195
    %v197 = vmul.f32 %v192, %v196
    %vm198 = vweird.f32 %v181
    %vm199 = vweird.f32 %v192
    %vm200 = vmor %vm198, %vm199
    %v201 = vsel %vm200, %v192, %v197
    %v202 = vmul.f32 %v174, %v191
    %v203 = vmul.f32 %v175, %v201
    %v204 = vmul.f32 %v202, %v146
    %v205 = vmul.f32 %v203, %v146
    %v206 = vadd.f32 %v204, %v147
    %v207 = vadd.f32 %v205, %v147
    %v208 = vpack.c.bf16 %v207, %v206
    %v209 = vld [vmem:[#allocation2] sm:$0xff]
    %v210 = vld [vmem:[#allocation2 + $0x8] sm:$0xf]
    %v211 = vld [vmem:[#allocation2 + $0x44] sm:$0xff]
    %v212 = vld [vmem:[#allocation2 + $0x4c] sm:$0xf]
    %v213 = vld [vmem:[#allocation2 + $0x88] sm:$0xff]
    %v214 = vld [vmem:[#allocation2 + $0x90] sm:$0xf]
    %v215 = vld [vmem:[#allocation2 + $0xcc] sm:$0xff]
    %v216 = vld [vmem:[#allocation2 + $0xd4] sm:$0xf]
    %v217 = vld [vmem:[#allocation2 + $0x110] sm:$0xff]
    %v218 = vld [vmem:[#allocation2 + $0x118] sm:$0xf]
    %v219 = vld [vmem:[#allocation2 + $0x154] sm:$0xff]
    %v220 = vld [vmem:[#allocation2 + $0x15c] sm:$0xf]
    %v221 = vld [vmem:[#allocation2 + $0x198] sm:$0xff]
    %v222 = vld [vmem:[#allocation2 + $0x1a0] sm:$0xf]
    %v223 = vld [vmem:[#allocation2 + $0x1dc] sm:$0xff]
    %v224 = vld [vmem:[#allocation2 + $0x1e4] sm:$0xf]
    %s225 = scalar_lea.vmem [#allocation4], 51
    %v226 = vld [vmem:[%s225] ss:$8 sm:$0x7]
    %v228 = vperm.slane %v226, 0
    %v229 = vperm.slane %v226, 1
    %v230 = vperm.slane %v226, 2
    %v250 = vunpack.c.l.b16 %v209
    %v251 = vunpack.c.h.b16 %v209
    %v252 = vunpack.c.l.b16 %v210
    %v253 = vunpack.c.l.b16 %v211
    %v254 = vunpack.c.h.b16 %v211
    %v255 = vunpack.c.l.b16 %v212
    %v256 = vunpack.c.l.b16 %v213
    %v257 = vunpack.c.h.b16 %v213
    %v258 = vunpack.c.l.b16 %v214
    %v259 = vunpack.c.l.b16 %v215
    %v260 = vunpack.c.h.b16 %v215
    %v261 = vunpack.c.l.b16 %v216
    %v262 = vunpack.c.l.b16 %v217
    %v263 = vunpack.c.h.b16 %v217
    %v264 = vunpack.c.l.b16 %v218
    %v265 = vunpack.c.l.b16 %v219
    %v266 = vunpack.c.h.b16 %v219
    %v267 = vunpack.c.l.b16 %v220
    %v268 = vunpack.c.l.b16 %v221
    %v269 = vunpack.c.h.b16 %v221
    %v270 = vunpack.c.l.b16 %v222
    %v271 = vunpack.c.l.b16 %v223
    %v272 = vunpack.c.h.b16 %v223
    %v273 = vunpack.c.l.b16 %v224
    %v274 = vpack.c.b16 %v253, %v250
    %v275 = vpack.c.b16 %v254, %v251
    %v276 = vpack.c.b16 %v255, %v252
    %v277 = vpack.c.b16 %v259, %v256
    %v278 = vpack.c.b16 %v260, %v257
    %v279 = vpack.c.b16 %v261, %v258
    %v280 = vpack.c.b16 %v265, %v262
    %v281 = vpack.c.b16 %v266, %v263
    %v282 = vpack.c.b16 %v267, %v264
    %v283 = vpack.c.b16 %v271, %v268
    %v284 = vpack.c.b16 %v272, %v269
    %v285 = vpack.c.b16 %v273, %v270
    %v299 = vsel %vm148, %v208, 0
    %301 = vmatpush.bf16.msra.mxu0 0
    %302 = vmatpush.bf16.msra.mxu0 0
    %303 = vmatpush.bf16.msra.mxu0 0
    %304 = vmatpush.bf16.msra.mxu0 0
    %305 = vmatpush.bf16.msra.mxu0 %v283
    %306 = vmatpush.bf16.msra.mxu0 %v280
    %307 = vmatpush.bf16.msra.mxu0 %v277
    %308 = vmatpush.bf16.msra.mxu0 %v274
    %309 = vmatmul.bf16.gmra.mxu0 %v299
    %v310 = vpop.f32.mrf.mxu0
    %v311 = vadd.f32 %v228, %v310
    %v312 = vpop.f32.mrf.mxu0
    %v313 = vadd.f32 %v228, %v312
    %314 = vdwg.mxu0
    %315 = vmatpush.bf16.msra.mxu0 0
    %316 = vmatpush.bf16.msra.mxu0 0
    %317 = vmatpush.bf16.msra.mxu0 0
    %318 = vmatpush.bf16.msra.mxu0 0
    %319 = vmatpush.bf16.msra.mxu0 %v284
    %320 = vmatpush.bf16.msra.mxu0 %v281
    %321 = vmatpush.bf16.msra.mxu0 %v278
    %322 = vmatpush.bf16.msra.mxu0 %v275
    %323 = vmatmul.bf16.gmra.mxu0 %v299
    %v324 = vpop.f32.mrf.mxu0
    %v325 = vadd.f32 %v229, %v324
    %v326 = vpop.f32.mrf.mxu0
    %v327 = vadd.f32 %v229, %v326
    %328 = vdwg.mxu0
    %329 = vmatpush.bf16.msra.mxu0 0
    %330 = vmatpush.bf16.msra.mxu0 0
    %331 = vmatpush.bf16.msra.mxu0 0
    %332 = vmatpush.bf16.msra.mxu0 0
    %333 = vmatpush.bf16.msra.mxu0 %v285
    %334 = vmatpush.bf16.msra.mxu0 %v282
    %335 = vmatpush.bf16.msra.mxu0 %v279
    %336 = vmatpush.bf16.msra.mxu0 %v276
    %337 = vmatmul.bf16.gmra.mxu0 %v299
    %v338 = vpop.f32.mrf.mxu0
    %v339 = vadd.f32 %v230, %v338
    %v340 = vpop.f32.mrf.mxu0
    %v341 = vadd.f32 %v230, %v340
    %342 = vdwg.mxu0
    %v343 = vmul.f32 %v311, %v53
    %v344 = vmul.f32 %v313, %v54
    %v345 = vmul.f32 %v325, %v53
    %v346 = vmul.f32 %v327, %v54
    %349 = vrot.lane.b32.xlu0 %v345, 64
    %v350 = vpop.permute.xlu0 %349
    %351 = vrot.lane.b32.xlu0 %v346, 64
    %v352 = vpop.permute.xlu0 %351
    %v355 = vadd.f32 %v343, %v350
    %v356 = vadd.f32 %v344, %v352
    %359 = vrot.lane.b32.xlu0 %v53, 64
    %v360 = vpop.permute.xlu0 %359
    %361 = vrot.lane.b32.xlu0 %v54, 64
    %v362 = vpop.permute.xlu0 %361
    %v365 = vmul.f32 %v311, %v360
    %v366 = vmul.f32 %v313, %v362
    %v367 = vmul.f32 %v339, %v360
    %v368 = vmul.f32 %v341, %v362
    %371 = vrot.lane.b32.xlu0 %v367, 64
    %v372 = vpop.permute.xlu0 %371
    %373 = vrot.lane.b32.xlu0 %v368, 64
    %v374 = vpop.permute.xlu0 %373
    %v377 = vadd.f32 %v365, %v372
    %v378 = vadd.f32 %v366, %v374
    %v379 = vpack.c.bf16 %v356, %v355
    %v380 = vpack.c.bf16 %v378, %v377
    %382 = vrot.lane.b32.xlu0 %v380, 64
    %v383 = vpop.permute.xlu0 %382
    %v385 = vsel %vm148, %v379, 0
    %v388 = vsel %vm148, %v383, 0
    %390 = vmatpush.bf16.xpose.msra.mxu0 0
    %391 = vmatpush.bf16.xpose.msra.mxu0 0
    %392 = vmatpush.bf16.xpose.msra.mxu0 0
    %393 = vmatpush.bf16.xpose.msra.mxu0 0
    %394 = vmatpush.bf16.xpose.msra.mxu0 0
    %395 = vmatpush.bf16.xpose.msra.mxu0 0
    %396 = vmatpush.bf16.xpose.msra.mxu0 0
    %397 = vmatpush.bf16.xpose.msra.mxu0 %v388
    %398 = vmatmul.bf16.gmra.mxu0 %v385
    %v399 = vpop.f32.mrf.mxu0
    %v400 = vadd.f32 %v55, %v399
    %v401 = vpop.f32.mrf.mxu0
    %v402 = vadd.f32 %v56, %v401
    %403 = vdwg.mxu0
    %v404 = vsel %vm116, %v400, -inf
    %405 = vmax.xlane.f32.xlu0 %v404
    %v406 = vpop.xlane.xlu0 %405
    %v407 = vsel %vm116, %v402, -inf
    %408 = vmax.xlane.f32.xlu0 %v407
    %v409 = vpop.xlane.xlu0 %408
    %v410 = vsub.f32 %v400, %v406
    %v411 = vsub.f32 %v402, %v409
    %v412 = vmul.f32 %v410, 1.442695
    %v413 = vpow.pop %v412
    %v414 = vmul.f32 %v411, 1.442695
    %v415 = vpow.pop %v414
    %v416 = vsel %vm116, %v413, 0.0
    %417 = vadd.xlane.f32.xlu0 %v416
    %v418 = vpop.xlane.xlu0 %417
    %v419 = vsel %vm116, %v415, 0.0
    %420 = vadd.xlane.f32.xlu0 %v419
    %v421 = vpop.xlane.xlu0 %420
    %v422 = vrcp.pop %v418
    %v423 = vrcp.pop %v421
    %v424 = vmul.f32 %v413, %v422
    %v425 = vmul.f32 %v415, %v423
    %v426 = vpack.c.bf16 %v425, %v424
    %v427 = vpack.c.bf16 %v327, %v325
    %v429 = vsel %vm116, %v426, 0
    %431 = vmatpush.bf16.msra.mxu0 0
    %432 = vmatpush.bf16.msra.mxu0 0
    %433 = vmatpush.bf16.msra.mxu0 0
    %434 = vmatpush.bf16.msra.mxu0 0
    %435 = vmatpush.bf16.msra.mxu0 0
    %436 = vmatpush.bf16.msra.mxu0 0
    %437 = vmatpush.bf16.msra.mxu0 0
    %438 = vmatpush.bf16.msra.mxu0 %v427
    %439 = vmatmul.bf16.gmra.mxu0 %v429
    %v440 = vpop.f32.mrf.mxu0
    %v441 = vadd.f32 0.0, %v440
    %v442 = vpop.f32.mrf.mxu0
    %v443 = vadd.f32 0.0, %v442
    %444 = vdwg.mxu0
    %v445 = vpack.c.bf16 %v443, %v441
    %v446 = vld [vmem:[#allocation2 + $0xc] sm:$0xf]
    %v447 = vld [vmem:[#allocation2 + $0x50] sm:$0xf]
    %v448 = vld [vmem:[#allocation2 + $0x94] sm:$0xf]
    %v449 = vld [vmem:[#allocation2 + $0xd8] sm:$0xf]
    %v450 = vld [vmem:[#allocation2 + $0x11c] sm:$0xf]
    %v451 = vld [vmem:[#allocation2 + $0x160] sm:$0xf]
    %v452 = vld [vmem:[#allocation2 + $0x1a4] sm:$0xf]
    %v453 = vld [vmem:[#allocation2 + $0x1e8] sm:$0xf]
    %v454 = vld [vmem:[#allocation4 + $0x34] ss:$0 sm:$0xff]
    %v463 = vunpack.c.l.b16 %v446
    %v464 = vunpack.c.l.b16 %v447
    %v465 = vunpack.c.l.b16 %v448
    %v466 = vunpack.c.l.b16 %v449
    %v467 = vunpack.c.l.b16 %v450
    %v468 = vunpack.c.l.b16 %v451
    %v469 = vunpack.c.l.b16 %v452
    %v470 = vunpack.c.l.b16 %v453
    %v471 = vpack.c.b16 %v464, %v463
    %v472 = vpack.c.b16 %v466, %v465
    %v473 = vpack.c.b16 %v468, %v467
    %v474 = vpack.c.b16 %v470, %v469
    %v480 = vsel %vm148, %v445, 0
    %482 = vmatpush.bf16.msra.mxu0 0
    %483 = vmatpush.bf16.msra.mxu0 0
    %484 = vmatpush.bf16.msra.mxu0 0
    %485 = vmatpush.bf16.msra.mxu0 0
    %486 = vmatpush.bf16.msra.mxu0 %v474
    %487 = vmatpush.bf16.msra.mxu0 %v473
    %488 = vmatpush.bf16.msra.mxu0 %v472
    %489 = vmatpush.bf16.msra.mxu0 %v471
    %490 = vmatmul.bf16.gmra.mxu0 %v480
    %v491 = vpop.f32.mrf.mxu0
    %v492 = vadd.f32 %v454, %v491
    %v493 = vpop.f32.mrf.mxu0
    %v494 = vadd.f32 %v454, %v493
    %495 = vdwg.mxu0
    %v496 = vadd.f32 %v141, %v492
    %v497 = vadd.f32 %v144, %v494
    %v498 = vld [vmem:[#allocation4 + $0x35] ss:$0 sm:$0xff]
    %v499 = vld [vmem:[#allocation4 + $0x36] ss:$0 sm:$0xff]
    %v500 = vsel %vm148, %v496, 0.0
    %501 = vadd.xlane.f32.xlu0 %v500
    %v502 = vpop.xlane.xlu0 %501
    %v503 = vsel %vm148, %v497, 0.0
    %504 = vadd.xlane.f32.xlu0 %v503
    %v505 = vpop.xlane.xlu0 %504
    %v506 = vmul.f32 %v502, %v161
    %v507 = vmul.f32 %v505, %v161
    %v508 = vmul.f32 %v496, %v496
    %v509 = vmul.f32 %v497, %v497
    %v510 = vsel %vm148, %v508, 0.0
    %511 = vadd.xlane.f32.xlu0 %v510
    %v512 = vpop.xlane.xlu0 %511
    %v513 = vsel %vm148, %v509, 0.0
    %514 = vadd.xlane.f32.xlu0 %v513
    %v515 = vpop.xlane.xlu0 %514
    %v516 = vmul.f32 %v512, %v161
    %v517 = vmul.f32 %v515, %v161
    %v518 = vsub.f32 %v496, %v506
    %v519 = vsub.f32 %v497, %v507
    %v520 = vmul.f32 %v506, %v506
    %v521 = vmul.f32 %v507, %v507
    %v522 = vsub.f32 %v516, %v520
    %v523 = vsub.f32 %v517, %v521
    %v524 = vadd.f32 %v522, 1e-05
    %v525 = vadd.f32 %v523, 1e-05
    %v526 = vrsqrt.pop %v524
    %v527 = vmul.f32 %v526, %v524
    %v528 = vmul.f32 %v527, %v526
    %v529 = vmul.f32 0.5, %v528
    %v530 = vsub.f32 1.5, %v529
    %v531 = vmul.f32 %v526, %v530
    %vm532 = vweird.f32 %v524
    %vm533 = vweird.f32 %v526
    %vm534 = vmor %vm532, %vm533
    %v535 = vsel %vm534, %v526, %v531
    %v536 = vrsqrt.pop %v525
    %v537 = vmul.f32 %v536, %v525
    %v538 = vmul.f32 %v537, %v536
    %v539 = vmul.f32 0.5, %v538
    %v540 = vsub.f32 1.5, %v539
    %v541 = vmul.f32 %v536, %v540
    %vm542 = vweird.f32 %v525
    %vm543 = vweird.f32 %v536
    %vm544 = vmor %vm542, %vm543
    %v545 = vsel %vm544, %v536, %v541
    %v546 = vmul.f32 %v518, %v535
    %v547 = vmul.f32 %v519, %v545
    %v548 = vmul.f32 %v546, %v498
    %v549 = vmul.f32 %v547, %v498
    %v550 = vadd.f32 %v548, %v499
    %v551 = vadd.f32 %v549, %v499
    %v552 = vpack.c.bf16 %v551, %v550
    %v553 = vld [vmem:[#allocation2 + $0x10] sm:$0xff]
    %v554 = vld [vmem:[#allocation2 + $0x54] sm:$0xff]
    %v555 = vld [vmem:[#allocation2 + $0x98] sm:$0xff]
    %v556 = vld [vmem:[#allocation2 + $0xdc] sm:$0xff]
    %v557 = vld [vmem:[#allocation2 + $0x120] sm:$0xff]
    %v558 = vld [vmem:[#allocation2 + $0x164] sm:$0xff]
    %v559 = vld [vmem:[#allocation2 + $0x1a8] sm:$0xff]
    %v560 = vld [vmem:[#allocation2 + $0x1ec] sm:$0xff]
    %s561 = scalar_lea.vmem [#allocation4], 55
    %v562 = vld [vmem:[%s561] ss:$8 sm:$0x3]
    %v564 = vperm.slane %v562, 0
    %v565 = vperm.slane %v562, 1
    %v576 = vunpack.c.l.b16 %v553
    %v577 = vunpack.c.h.b16 %v553
    %v578 = vunpack.c.l.b16 %v554
    %v579 = vunpack.c.h.b16 %v554
    %v580 = vunpack.c.l.b16 %v555
    %v581 = vunpack.c.h.b16 %v555
    %v582 = vunpack.c.l.b16 %v556
    %v583 = vunpack.c.h.b16 %v556
    %v584 = vunpack.c.l.b16 %v557
    %v585 = vunpack.c.h.b16 %v557
    %v586 = vunpack.c.l.b16 %v558
    %v587 = vunpack.c.h.b16 %v558
    %v588 = vunpack.c.l.b16 %v559
    %v589 = vunpack.c.h.b16 %v559
    %v590 = vunpack.c.l.b16 %v560
    %v591 = vunpack.c.h.b16 %v560
    %v592 = vpack.c.b16 %v578, %v576
    %v593 = vpack.c.b16 %v579, %v577
    %v594 = vpack.c.b16 %v582, %v580
    %v595 = vpack.c.b16 %v583, %v581
    %v596 = vpack.c.b16 %v586, %v584
    %v597 = vpack.c.b16 %v587, %v585
    %v598 = vpack.c.b16 %v590, %v588
    %v599 = vpack.c.b16 %v591, %v589
    %v609 = vsel %vm148, %v552, 0
    %611 = vmatpush.bf16.msra.mxu0 0
    %612 = vmatpush.bf16.msra.mxu0 0
    %613 = vmatpush.bf16.msra.mxu0 0
    %614 = vmatpush.bf16.msra.mxu0 0
    %615 = vmatpush.bf16.msra.mxu0 %v598
    %616 = vmatpush.bf16.msra.mxu0 %v596
    %617 = vmatpush.bf16.msra.mxu0 %v594
    %618 = vmatpush.bf16.msra.mxu0 %v592
    %619 = vmatmul.bf16.gmra.mxu0 %v609
    %v620 = vpop.f32.mrf.mxu0
    %v621 = vadd.f32 %v564, %v620
    %v622 = vpop.f32.mrf.mxu0
    %v623 = vadd.f32 %v564, %v622
    %624 = vdwg.mxu0
    %625 = vmatpush.bf16.msra.mxu0 0
    %626 = vmatpush.bf16.msra.mxu0 0
    %627 = vmatpush.bf16.msra.mxu0 0
    %628 = vmatpush.bf16.msra.mxu0 0
    %629 = vmatpush.bf16.msra.mxu0 %v599
    %630 = vmatpush.bf16.msra.mxu0 %v597
    %631 = vmatpush.bf16.msra.mxu0 %v595
    %632 = vmatpush.bf16.msra.mxu0 %v593
    %633 = vmatmul.bf16.gmra.mxu0 %v609
    %v634 = vpop.f32.mrf.mxu0
    %v635 = vadd.f32 %v565, %v634
    %v636 = vpop.f32.mrf.mxu0
    %v637 = vadd.f32 %v565, %v636
    %638 = vdwg.mxu0
    %v639 = vmul.f32 %v621, %v621
    %v640 = vmul.f32 %v635, %v635
    %v641 = vmul.f32 %v623, %v623
    %v642 = vmul.f32 %v637, %v637
    %v643 = vmul.f32 %v621, %v639
    %v644 = vmul.f32 %v635, %v640
    %v645 = vmul.f32 %v623, %v641
    %v646 = vmul.f32 %v637, %v642
    %v647 = vmul.f32 %v643, 0.044715
    %v648 = vmul.f32 %v644, 0.044715
    %v649 = vmul.f32 %v645, 0.044715
    %v650 = vmul.f32 %v646, 0.044715
    %v651 = vadd.f32 %v621, %v647
    %v652 = vadd.f32 %v635, %v648
    %v653 = vadd.f32 %v623, %v649
    %v654 = vadd.f32 %v637, %v650
    %v655 = vmul.f32 %v651, 0.7978846
    %v656 = vmul.f32 %v652, 0.7978846
    %v657 = vmul.f32 %v653, 0.7978846
    %v658 = vmul.f32 %v654, 0.7978846
    %v659 = vtanh.pop %v655
    %v660 = vtanh.pop %v656
    %v661 = vtanh.pop %v657
    %v662 = vtanh.pop %v658
    %v663 = vadd.f32 %v659, 1.0
    %v664 = vadd.f32 %v660, 1.0
    %v665 = vadd.f32 %v661, 1.0
    %v666 = vadd.f32 %v662, 1.0
    %v667 = vmul.f32 %v663, 0.5
    %v668 = vmul.f32 %v664, 0.5
    %v669 = vmul.f32 %v665, 0.5
    %v670 = vmul.f32 %v666, 0.5
    %v671 = vmul.f32 %v621, %v667
    %v672 = vmul.f32 %v635, %v668
    %v673 = vmul.f32 %v623, %v669
    %v674 = vmul.f32 %v637, %v670
    %v675 = vpack.c.bf16 %v673, %v671
    %v676 = vpack.c.bf16 %v674, %v672
    %v677 = vld [vmem:[#allocation2 + $0x18] sm:$0xff]
    %v678 = vld [vmem:[#allocation2 + $0x5c] sm:$0xff]
    %v679 = vld [vmem:[#allocation2 + $0xa0] sm:$0xff]
    %v680 = vld [vmem:[#allocation2 + $0xe4] sm:$0xff]
    %v681 = vld [vmem:[#allocation2 + $0x128] sm:$0xff]
    %v682 = vld [vmem:[#allocation2 + $0x16c] sm:$0xff]
    %v683 = vld [vmem:[#allocation2 + $0x1b0] sm:$0xff]
    %v684 = vld [vmem:[#allocation2 + $0x1f4] sm:$0xff]
    %v685 = vld [vmem:[#allocation4 + $0x48] ss:$0 sm:$0xff]
    %v694 = vunpack.c.l.b16 %v677
    %v695 = vunpack.c.h.b16 %v677
    %v696 = vunpack.c.l.b16 %v678
    %v697 = vunpack.c.h.b16 %v678
    %v698 = vunpack.c.l.b16 %v679
    %v699 = vunpack.c.h.b16 %v679
    %v700 = vunpack.c.l.b16 %v680
    %v701 = vunpack.c.h.b16 %v680
    %v702 = vunpack.c.l.b16 %v681
    %v703 = vunpack.c.h.b16 %v681
    %v704 = vunpack.c.l.b16 %v682
    %v705 = vunpack.c.h.b16 %v682
    %v706 = vunpack.c.l.b16 %v683
    %v707 = vunpack.c.h.b16 %v683
    %v708 = vunpack.c.l.b16 %v684
    %v709 = vunpack.c.h.b16 %v684
    %v710 = vpack.c.b16 %v696, %v694
    %v711 = vpack.c.b16 %v697, %v695
    %v712 = vpack.c.b16 %v700, %v698
    %v713 = vpack.c.b16 %v701, %v699
    %v714 = vpack.c.b16 %v704, %v702
    %v715 = vpack.c.b16 %v705, %v703
    %v716 = vpack.c.b16 %v708, %v706
    %v717 = vpack.c.b16 %v709, %v707
    %726 = vmatpush.bf16.xpose.msra.mxu0 0
    %727 = vmatpush.bf16.xpose.msra.mxu0 0
    %728 = vmatpush.bf16.xpose.msra.mxu0 0
    %729 = vmatpush.bf16.xpose.msra.mxu0 0
    %730 = vmatpush.bf16.xpose.msra.mxu0 %v716
    %731 = vmatpush.bf16.xpose.msra.mxu0 %v714
    %732 = vmatpush.bf16.xpose.msra.mxu0 %v712
    %733 = vmatpush.bf16.xpose.msra.mxu0 %v710
    %734 = vmatmul.bf16.gmra.mxu0 %v675
    %v735 = vpop.f32.mrf.mxu0
    %v736 = vadd.f32 %v685, %v735
    %v737 = vpop.f32.mrf.mxu0
    %v738 = vadd.f32 %v685, %v737
    %739 = vdwg.mxu0
    %740 = vmatpush.bf16.xpose.msra.mxu0 0
    %741 = vmatpush.bf16.xpose.msra.mxu0 0
    %742 = vmatpush.bf16.xpose.msra.mxu0 0
    %743 = vmatpush.bf16.xpose.msra.mxu0 0
    %744 = vmatpush.bf16.xpose.msra.mxu0 %v717
    %745 = vmatpush.bf16.xpose.msra.mxu0 %v715
    %746 = vmatpush.bf16.xpose.msra.mxu0 %v713
    %747 = vmatpush.bf16.xpose.msra.mxu0 %v711
    %748 = vmatmul.bf16.gmra.mxu0 %v676
    %v749 = vpop.f32.mrf.mxu0
    %v750 = vadd.f32 %v736, %v749
    %v751 = vpop.f32.mrf.mxu0
    %v752 = vadd.f32 %v738, %v751
    %753 = vdwg.mxu0
    %v754 = vadd.f32 %v496, %v750
    %v755 = vadd.f32 %v497, %v752
    %v756 = vld [vmem:[#allocation4 + $0x49] ss:$0 sm:$0xff]
    %v757 = vld [vmem:[#allocation4 + $0x4a] ss:$0 sm:$0xff]
    %v758 = vsel %vm148, %v754, 0.0
    %759 = vadd.xlane.f32.xlu0 %v758
    %v760 = vpop.xlane.xlu0 %759
    %v761 = vsel %vm148, %v755, 0.0
    %762 = vadd.xlane.f32.xlu0 %v761
    %v763 = vpop.xlane.xlu0 %762
    %v764 = vmul.f32 %v760, %v161
    %v765 = vmul.f32 %v763, %v161
    %v766 = vmul.f32 %v754, %v754
    %v767 = vmul.f32 %v755, %v755
    %v768 = vsel %vm148, %v766, 0.0
    %769 = vadd.xlane.f32.xlu0 %v768
    %v770 = vpop.xlane.xlu0 %769
    %v771 = vsel %vm148, %v767, 0.0
    %772 = vadd.xlane.f32.xlu0 %v771
    %v773 = vpop.xlane.xlu0 %772
    %v774 = vmul.f32 %v770, %v161
    %v775 = vmul.f32 %v773, %v161
    %v776 = vsub.f32 %v754, %v764
    %v777 = vsub.f32 %v755, %v765
    %v778 = vmul.f32 %v764, %v764
    %v779 = vmul.f32 %v765, %v765
    %v780 = vsub.f32 %v774, %v778
    %v781 = vsub.f32 %v775, %v779
    %v782 = vadd.f32 %v780, 1e-05
    %v783 = vadd.f32 %v781, 1e-05
    %v784 = vrsqrt.pop %v782
    %v785 = vmul.f32 %v784, %v782
    %v786 = vmul.f32 %v785, %v784
    %v787 = vmul.f32 0.5, %v786
    %v788 = vsub.f32 1.5, %v787
    %v789 = vmul.f32 %v784, %v788
    %vm790 = vweird.f32 %v782
    %vm791 = vweird.f32 %v784
    %vm792 = vmor %vm790, %vm791
    %v793 = vsel %vm792, %v784, %v789
    %v794 = vrsqrt.pop %v783
    %v795 = vmul.f32 %v794, %v783
    %v796 = vmul.f32 %v795, %v794
    %v797 = vmul.f32 0.5, %v796
    %v798 = vsub.f32 1.5, %v797
    %v799 = vmul.f32 %v794, %v798
    %vm800 = vweird.f32 %v783
    %vm801 = vweird.f32 %v794
    %vm802 = vmor %vm800, %vm801
    %v803 = vsel %vm802, %v794, %v799
    %v804 = vmul.f32 %v776, %v793
    %v805 = vmul.f32 %v777, %v803
    %v806 = vmul.f32 %v804, %v756
    %v807 = vmul.f32 %v805, %v756
    %v808 = vadd.f32 %v806, %v757
    %v809 = vadd.f32 %v807, %v757
    %v810 = vpack.c.bf16 %v809, %v808
    %v811 = vld [vmem:[#allocation2 + $0x20] sm:$0xff]
    %v812 = vld [vmem:[#allocation2 + $0x28] sm:$0xf]
    %v813 = vld [vmem:[#allocation2 + $0x64] sm:$0xff]
    %v814 = vld [vmem:[#allocation2 + $0x6c] sm:$0xf]
    %v815 = vld [vmem:[#allocation2 + $0xa8] sm:$0xff]
    %v816 = vld [vmem:[#allocation2 + $0xb0] sm:$0xf]
    %v817 = vld [vmem:[#allocation2 + $0xec] sm:$0xff]
    %v818 = vld [vmem:[#allocation2 + $0xf4] sm:$0xf]
    %v819 = vld [vmem:[#allocation2 + $0x130] sm:$0xff]
    %v820 = vld [vmem:[#allocation2 + $0x138] sm:$0xf]
    %v821 = vld [vmem:[#allocation2 + $0x174] sm:$0xff]
    %v822 = vld [vmem:[#allocation2 + $0x17c] sm:$0xf]
    %v823 = vld [vmem:[#allocation2 + $0x1b8] sm:$0xff]
    %v824 = vld [vmem:[#allocation2 + $0x1c0] sm:$0xf]
    %v825 = vld [vmem:[#allocation2 + $0x1fc] sm:$0xff]
    %v826 = vld [vmem:[#allocation2 + $0x204] sm:$0xf]
    %s827 = scalar_lea.vmem [#allocation4], 75
    %v828 = vld [vmem:[%s827] ss:$8 sm:$0x7]
    %v830 = vperm.slane %v828, 0
    %v831 = vperm.slane %v828, 1
    %v832 = vperm.slane %v828, 2
    %v852 = vunpack.c.l.b16 %v811
    %v853 = vunpack.c.h.b16 %v811
    %v854 = vunpack.c.l.b16 %v812
    %v855 = vunpack.c.l.b16 %v813
    %v856 = vunpack.c.h.b16 %v813
    %v857 = vunpack.c.l.b16 %v814
    %v858 = vunpack.c.l.b16 %v815
    %v859 = vunpack.c.h.b16 %v815
    %v860 = vunpack.c.l.b16 %v816
    %v861 = vunpack.c.l.b16 %v817
    %v862 = vunpack.c.h.b16 %v817
    %v863 = vunpack.c.l.b16 %v818
    %v864 = vunpack.c.l.b16 %v819
    %v865 = vunpack.c.h.b16 %v819
    %v866 = vunpack.c.l.b16 %v820
    %v867 = vunpack.c.l.b16 %v821
    %v868 = vunpack.c.h.b16 %v821
    %v869 = vunpack.c.l.b16 %v822
    %v870 = vunpack.c.l.b16 %v823
    %v871 = vunpack.c.h.b16 %v823
    %v872 = vunpack.c.l.b16 %v824
    %v873 = vunpack.c.l.b16 %v825
    %v874 = vunpack.c.h.b16 %v825
    %v875 = vunpack.c.l.b16 %v826
    %v876 = vpack.c.b16 %v855, %v852
    %v877 = vpack.c.b16 %v856, %v853
    %v878 = vpack.c.b16 %v857, %v854
    %v879 = vpack.c.b16 %v861, %v858
    %v880 = vpack.c.b16 %v862, %v859
    %v881 = vpack.c.b16 %v863, %v860
    %v882 = vpack.c.b16 %v867, %v864
    %v883 = vpack.c.b16 %v868, %v865
    %v884 = vpack.c.b16 %v869, %v866
    %v885 = vpack.c.b16 %v873, %v870
    %v886 = vpack.c.b16 %v874, %v871
    %v887 = vpack.c.b16 %v875, %v872
    %v901 = vsel %vm148, %v810, 0
    %903 = vmatpush.bf16.msra.mxu0 0
    %904 = vmatpush.bf16.msra.mxu0 0
    %905 = vmatpush.bf16.msra.mxu0 0
    %906 = vmatpush.bf16.msra.mxu0 0
    %907 = vmatpush.bf16.msra.mxu0 %v885
    %908 = vmatpush.bf16.msra.mxu0 %v882
    %909 = vmatpush.bf16.msra.mxu0 %v879
    %910 = vmatpush.bf16.msra.mxu0 %v876
    %911 = vmatmul.bf16.gmra.mxu0 %v901
    %v912 = vpop.f32.mrf.mxu0
    %v913 = vadd.f32 %v830, %v912
    %v914 = vpop.f32.mrf.mxu0
    %v915 = vadd.f32 %v830, %v914
    %916 = vdwg.mxu0
    %917 = vmatpush.bf16.msra.mxu0 0
    %918 = vmatpush.bf16.msra.mxu0 0
    %919 = vmatpush.bf16.msra.mxu0 0
    %920 = vmatpush.bf16.msra.mxu0 0
    %921 = vmatpush.bf16.msra.mxu0 %v886
    %922 = vmatpush.bf16.msra.mxu0 %v883
    %923 = vmatpush.bf16.msra.mxu0 %v880
    %924 = vmatpush.bf16.msra.mxu0 %v877
    %925 = vmatmul.bf16.gmra.mxu0 %v901
    %v926 = vpop.f32.mrf.mxu0
    %v927 = vadd.f32 %v831, %v926
    %v928 = vpop.f32.mrf.mxu0
    %v929 = vadd.f32 %v831, %v928
    %930 = vdwg.mxu0
    %931 = vmatpush.bf16.msra.mxu0 0
    %932 = vmatpush.bf16.msra.mxu0 0
    %933 = vmatpush.bf16.msra.mxu0 0
    %934 = vmatpush.bf16.msra.mxu0 0
    %935 = vmatpush.bf16.msra.mxu0 %v887
    %936 = vmatpush.bf16.msra.mxu0 %v884
    %937 = vmatpush.bf16.msra.mxu0 %v881
    %938 = vmatpush.bf16.msra.mxu0 %v878
    %939 = vmatmul.bf16.gmra.mxu0 %v901
    %v940 = vpop.f32.mrf.mxu0
    %v941 = vadd.f32 %v832, %v940
    %v942 = vpop.f32.mrf.mxu0
    %v943 = vadd.f32 %v832, %v942
    %944 = vdwg.mxu0
    %v945 = vmul.f32 %v913, %v53
    %v946 = vmul.f32 %v915, %v54
    %v947 = vmul.f32 %v927, %v53
    %v948 = vmul.f32 %v929, %v54
    %951 = vrot.lane.b32.xlu0 %v947, 64
    %v952 = vpop.permute.xlu0 %951
    %953 = vrot.lane.b32.xlu0 %v948, 64
    %v954 = vpop.permute.xlu0 %953
    %v957 = vadd.f32 %v945, %v952
    %v958 = vadd.f32 %v946, %v954
    %v959 = vmul.f32 %v913, %v360
    %v960 = vmul.f32 %v915, %v362
    %v961 = vmul.f32 %v941, %v360
    %v962 = vmul.f32 %v943, %v362
    %965 = vrot.lane.b32.xlu0 %v961, 64
    %v966 = vpop.permute.xlu0 %965
    %967 = vrot.lane.b32.xlu0 %v962, 64
    %v968 = vpop.permute.xlu0 %967
    %v971 = vadd.f32 %v959, %v966
    %v972 = vadd.f32 %v960, %v968
    %v973 = vpack.c.bf16 %v958, %v957
    %v974 = vpack.c.bf16 %v972, %v971
    %976 = vrot.lane.b32.xlu0 %v974, 64
    %v977 = vpop.permute.xlu0 %976
    %v979 = vsel %vm148, %v973, 0
    %v982 = vsel %vm148, %v977, 0
    %984 = vmatpush.bf16.xpose.msra.mxu0 0
    %985 = vmatpush.bf16.xpose.msra.mxu0 0
    %986 = vmatpush.bf16.xpose.msra.mxu0 0
    %987 = vmatpush.bf16.xpose.msra.mxu0 0
    %988 = vmatpush.bf16.xpose.msra.mxu0 0
    %989 = vmatpush.bf16.xpose.msra.mxu0 0
    %990 = vmatpush.bf16.xpose.msra.mxu0 0
    %991 = vmatpush.bf16.xpose.msra.mxu0 %v982
    %992 = vmatmul.bf16.gmra.mxu0 %v979
    %v993 = vpop.f32.mrf.mxu0
    %v994 = vadd.f32 %v55, %v993
    %v995 = vpop.f32.mrf.mxu0
    %v996 = vadd.f32 %v56, %v995
    %997 = vdwg.mxu0
    %v998 = vsel %vm116, %v994, -inf
    %999 = vmax.xlane.f32.xlu0 %v998
    %v1000 = vpop.xlane.xlu0 %999
    %v1001 = vsel %vm116, %v996, -inf
    %1002 = vmax.xlane.f32.xlu0 %v1001
    %v1003 = vpop.xlane.xlu0 %1002
    %v1004 = vsub.f32 %v994, %v1000
    %v1005 = vsub.f32 %v996, %v1003
    %v1006 = vmul.f32 %v1004, 1.442695
    %v1007 = vpow.pop %v1006
    %v1008 = vmul.f32 %v1005, 1.442695
    %v1009 = vpow.pop %v1008
    %v1010 = vsel %vm116, %v1007, 0.0
    %1011 = vadd.xlane.f32.xlu0 %v1010
    %v1012 = vpop.xlane.xlu0 %1011
    %v1013 = vsel %vm116, %v1009, 0.0
    %1014 = vadd.xlane.f32.xlu0 %v1013
    %v1015 = vpop.xlane.xlu0 %1014
    %v1016 = vrcp.pop %v1012
    %v1017 = vrcp.pop %v1015
    %v1018 = vmul.f32 %v1007, %v1016
    %v1019 = vmul.f32 %v1009, %v1017
    %v1020 = vpack.c.bf16 %v1019, %v1018
    %v1021 = vpack.c.bf16 %v929, %v927
    %v1023 = vsel %vm116, %v1020, 0
    %1025 = vmatpush.bf16.msra.mxu0 0
    %1026 = vmatpush.bf16.msra.mxu0 0
    %1027 = vmatpush.bf16.msra.mxu0 0
    %1028 = vmatpush.bf16.msra.mxu0 0
    %1029 = vmatpush.bf16.msra.mxu0 0
    %1030 = vmatpush.bf16.msra.mxu0 0
    %1031 = vmatpush.bf16.msra.mxu0 0
    %1032 = vmatpush.bf16.msra.mxu0 %v1021
    %1033 = vmatmul.bf16.gmra.mxu0 %v1023
    %v1034 = vpop.f32.mrf.mxu0
    %v1035 = vadd.f32 0.0, %v1034
    %v1036 = vpop.f32.mrf.mxu0
    %v1037 = vadd.f32 0.0, %v1036
    %1038 = vdwg.mxu0
    %v1039 = vpack.c.bf16 %v1037, %v1035
    %v1040 = vld [vmem:[#allocation2 + $0x2c] sm:$0xf]
    %v1041 = vld [vmem:[#allocation2 + $0x70] sm:$0xf]
    %v1042 = vld [vmem:[#allocation2 + $0xb4] sm:$0xf]
    %v1043 = vld [vmem:[#allocation2 + $0xf8] sm:$0xf]
    %v1044 = vld [vmem:[#allocation2 + $0x13c] sm:$0xf]
    %v1045 = vld [vmem:[#allocation2 + $0x180] sm:$0xf]
    %v1046 = vld [vmem:[#allocation2 + $0x1c4] sm:$0xf]
    %v1047 = vld [vmem:[#allocation2 + $0x208] sm:$0xf]
    %v1048 = vld [vmem:[#allocation4 + $0x4c] ss:$0 sm:$0xff]
    %v1057 = vunpack.c.l.b16 %v1040
    %v1058 = vunpack.c.l.b16 %v1041
    %v1059 = vunpack.c.l.b16 %v1042
    %v1060 = vunpack.c.l.b16 %v1043
    %v1061 = vunpack.c.l.b16 %v1044
    %v1062 = vunpack.c.l.b16 %v1045
    %v1063 = vunpack.c.l.b16 %v1046
    %v1064 = vunpack.c.l.b16 %v1047
    %v1065 = vpack.c.b16 %v1058, %v1057
    %v1066 = vpack.c.b16 %v1060, %v1059
    %v1067 = vpack.c.b16 %v1062, %v1061
    %v1068 = vpack.c.b16 %v1064, %v1063
    %v1074 = vsel %vm148, %v1039, 0
    %1076 = vmatpush.bf16.msra.mxu0 0
    %1077 = vmatpush.bf16.msra.mxu0 0
    %1078 = vmatpush.bf16.msra.mxu0 0
    %1079 = vmatpush.bf16.msra.mxu0 0
    %1080 = vmatpush.bf16.msra.mxu0 %v1068
    %1081 = vmatpush.bf16.msra.mxu0 %v1067
    %1082 = vmatpush.bf16.msra.mxu0 %v1066
    %1083 = vmatpush.bf16.msra.mxu0 %v1065
    %1084 = vmatmul.bf16.gmra.mxu0 %v1074
    %v1085 = vpop.f32.mrf.mxu0
    %v1086 = vadd.f32 %v1048, %v1085
    %v1087 = vpop.f32.mrf.mxu0
    %v1088 = vadd.f32 %v1048, %v1087
    %1089 = vdwg.mxu0
    %v1090 = vadd.f32 %v754, %v1086
    %v1091 = vadd.f32 %v755, %v1088
    %v1092 = vld [vmem:[#allocation4 + $0x4d] ss:$0 sm:$0xff]
    %v1093 = vld [vmem:[#allocation4 + $0x4e] ss:$0 sm:$0xff]
    %v1094 = vsel %vm148, %v1090, 0.0
    %1095 = vadd.xlane.f32.xlu0 %v1094
    %v1096 = vpop.xlane.xlu0 %1095
    %v1097 = vsel %vm148, %v1091, 0.0
    %1098 = vadd.xlane.f32.xlu0 %v1097
    %v1099 = vpop.xlane.xlu0 %1098
    %v1100 = vmul.f32 %v1096, %v161
    %v1101 = vmul.f32 %v1099, %v161
    %v1102 = vmul.f32 %v1090, %v1090
    %v1103 = vmul.f32 %v1091, %v1091
    %v1104 = vsel %vm148, %v1102, 0.0
    %1105 = vadd.xlane.f32.xlu0 %v1104
    %v1106 = vpop.xlane.xlu0 %1105
    %v1107 = vsel %vm148, %v1103, 0.0
    %1108 = vadd.xlane.f32.xlu0 %v1107
    %v1109 = vpop.xlane.xlu0 %1108
    %v1110 = vmul.f32 %v1106, %v161
    %v1111 = vmul.f32 %v1109, %v161
    %v1112 = vsub.f32 %v1090, %v1100
    %v1113 = vsub.f32 %v1091, %v1101
    %v1114 = vmul.f32 %v1100, %v1100
    %v1115 = vmul.f32 %v1101, %v1101
    %v1116 = vsub.f32 %v1110, %v1114
    %v1117 = vsub.f32 %v1111, %v1115
    %v1118 = vadd.f32 %v1116, 1e-05
    %v1119 = vadd.f32 %v1117, 1e-05
    %v1120 = vrsqrt.pop %v1118
    %v1121 = vmul.f32 %v1120, %v1118
    %v1122 = vmul.f32 %v1121, %v1120
    %v1123 = vmul.f32 0.5, %v1122
    %v1124 = vsub.f32 1.5, %v1123
    %v1125 = vmul.f32 %v1120, %v1124
    %vm1126 = vweird.f32 %v1118
    %vm1127 = vweird.f32 %v1120
    %vm1128 = vmor %vm1126, %vm1127
    %v1129 = vsel %vm1128, %v1120, %v1125
    %v1130 = vrsqrt.pop %v1119
    %v1131 = vmul.f32 %v1130, %v1119
    %v1132 = vmul.f32 %v1131, %v1130
    %v1133 = vmul.f32 0.5, %v1132
    %v1134 = vsub.f32 1.5, %v1133
    %v1135 = vmul.f32 %v1130, %v1134
    %vm1136 = vweird.f32 %v1119
    %vm1137 = vweird.f32 %v1130
    %vm1138 = vmor %vm1136, %vm1137
    %v1139 = vsel %vm1138, %v1130, %v1135
    %v1140 = vmul.f32 %v1112, %v1129
    %v1141 = vmul.f32 %v1113, %v1139
    %v1142 = vmul.f32 %v1140, %v1092
    %v1143 = vmul.f32 %v1141, %v1092
    %v1144 = vadd.f32 %v1142, %v1093
    %v1145 = vadd.f32 %v1143, %v1093
    %v1146 = vpack.c.bf16 %v1145, %v1144
    %v1147 = vld [vmem:[#allocation2 + $0x30] sm:$0xff]
    %v1148 = vld [vmem:[#allocation2 + $0x74] sm:$0xff]
    %v1149 = vld [vmem:[#allocation2 + $0xb8] sm:$0xff]
    %v1150 = vld [vmem:[#allocation2 + $0xfc] sm:$0xff]
    %v1151 = vld [vmem:[#allocation2 + $0x140] sm:$0xff]
    %v1152 = vld [vmem:[#allocation2 + $0x184] sm:$0xff]
    %v1153 = vld [vmem:[#allocation2 + $0x1c8] sm:$0xff]
    %v1154 = vld [vmem:[#allocation2 + $0x20c] sm:$0xff]
    %s1155 = scalar_lea.vmem [#allocation4], 79
    %v1156 = vld [vmem:[%s1155] ss:$8 sm:$0x3]
    %v1158 = vperm.slane %v1156, 0
    %v1159 = vperm.slane %v1156, 1
    %v1170 = vunpack.c.l.b16 %v1147
    %v1171 = vunpack.c.h.b16 %v1147
    %v1172 = vunpack.c.l.b16 %v1148
    %v1173 = vunpack.c.h.b16 %v1148
    %v1174 = vunpack.c.l.b16 %v1149
    %v1175 = vunpack.c.h.b16 %v1149
    %v1176 = vunpack.c.l.b16 %v1150
    %v1177 = vunpack.c.h.b16 %v1150
    %v1178 = vunpack.c.l.b16 %v1151
    %v1179 = vunpack.c.h.b16 %v1151
    %v1180 = vunpack.c.l.b16 %v1152
    %v1181 = vunpack.c.h.b16 %v1152
    %v1182 = vunpack.c.l.b16 %v1153
    %v1183 = vunpack.c.h.b16 %v1153
    %v1184 = vunpack.c.l.b16 %v1154
    %v1185 = vunpack.c.h.b16 %v1154
    %v1186 = vpack.c.b16 %v1172, %v1170
    %v1187 = vpack.c.b16 %v1173, %v1171
    %v1188 = vpack.c.b16 %v1176, %v1174
    %v1189 = vpack.c.b16 %v1177, %v1175
    %v1190 = vpack.c.b16 %v1180, %v1178
    %v1191 = vpack.c.b16 %v1181, %v1179
    %v1192 = vpack.c.b16 %v1184, %v1182
    %v1193 = vpack.c.b16 %v1185, %v1183
    %v1203 = vsel %vm148, %v1146, 0
    %1205 = vmatpush.bf16.msra.mxu0 0
    %1206 = vmatpush.bf16.msra.mxu0 0
    %1207 = vmatpush.bf16.msra.mxu0 0
    %1208 = vmatpush.bf16.msra.mxu0 0
    %1209 = vmatpush.bf16.msra.mxu0 %v1192
    %1210 = vmatpush.bf16.msra.mxu0 %v1190
    %1211 = vmatpush.bf16.msra.mxu0 %v1188
    %1212 = vmatpush.bf16.msra.mxu0 %v1186
    %1213 = vmatmul.bf16.gmra.mxu0 %v1203
    %v1214 = vpop.f32.mrf.mxu0
    %v1215 = vadd.f32 %v1158, %v1214
    %v1216 = vpop.f32.mrf.mxu0
    %v1217 = vadd.f32 %v1158, %v1216
    %1218 = vdwg.mxu0
    %1219 = vmatpush.bf16.msra.mxu0 0
    %1220 = vmatpush.bf16.msra.mxu0 0
    %1221 = vmatpush.bf16.msra.mxu0 0
    %1222 = vmatpush.bf16.msra.mxu0 0
    %1223 = vmatpush.bf16.msra.mxu0 %v1193
    %1224 = vmatpush.bf16.msra.mxu0 %v1191
    %1225 = vmatpush.bf16.msra.mxu0 %v1189
    %1226 = vmatpush.bf16.msra.mxu0 %v1187
    %1227 = vmatmul.bf16.gmra.mxu0 %v1203
    %v1228 = vpop.f32.mrf.mxu0
    %v1229 = vadd.f32 %v1159, %v1228
    %v1230 = vpop.f32.mrf.mxu0
    %v1231 = vadd.f32 %v1159, %v1230
    %1232 = vdwg.mxu0
    %v1233 = vmul.f32 %v1215, %v1215
    %v1234 = vmul.f32 %v1229, %v1229
    %v1235 = vmul.f32 %v1217, %v1217
    %v1236 = vmul.f32 %v1231, %v1231
    %v1237 = vmul.f32 %v1215, %v1233
    %v1238 = vmul.f32 %v1229, %v1234
    %v1239 = vmul.f32 %v1217, %v1235
    %v1240 = vmul.f32 %v1231, %v1236
    %v1241 = vmul.f32 %v1237, 0.044715
    %v1242 = vmul.f32 %v1238, 0.044715
    %v1243 = vmul.f32 %v1239, 0.044715
    %v1244 = vmul.f32 %v1240, 0.044715
    %v1245 = vadd.f32 %v1215, %v1241
    %v1246 = vadd.f32 %v1229, %v1242
    %v1247 = vadd.f32 %v1217, %v1243
    %v1248 = vadd.f32 %v1231, %v1244
    %v1249 = vmul.f32 %v1245, 0.7978846
    %v1250 = vmul.f32 %v1246, 0.7978846
    %v1251 = vmul.f32 %v1247, 0.7978846
    %v1252 = vmul.f32 %v1248, 0.7978846
    %v1253 = vtanh.pop %v1249
    %v1254 = vtanh.pop %v1250
    %v1255 = vtanh.pop %v1251
    %v1256 = vtanh.pop %v1252
    %v1257 = vadd.f32 %v1253, 1.0
    %v1258 = vadd.f32 %v1254, 1.0
    %v1259 = vadd.f32 %v1255, 1.0
    %v1260 = vadd.f32 %v1256, 1.0
    %v1261 = vmul.f32 %v1257, 0.5
    %v1262 = vmul.f32 %v1258, 0.5
    %v1263 = vmul.f32 %v1259, 0.5
    %v1264 = vmul.f32 %v1260, 0.5
    %v1265 = vmul.f32 %v1215, %v1261
    %v1266 = vmul.f32 %v1229, %v1262
    %v1267 = vmul.f32 %v1217, %v1263
    %v1268 = vmul.f32 %v1231, %v1264
    %v1269 = vpack.c.bf16 %v1267, %v1265
    %v1270 = vpack.c.bf16 %v1268, %v1266
    %v1271 = vld [vmem:[#allocation2 + $0x38] sm:$0xff]
    %v1272 = vld [vmem:[#allocation2 + $0x7c] sm:$0xff]
    %v1273 = vld [vmem:[#allocation2 + $0xc0] sm:$0xff]
    %v1274 = vld [vmem:[#allocation2 + $0x104] sm:$0xff]
    %v1275 = vld [vmem:[#allocation2 + $0x148] sm:$0xff]
    %v1276 = vld [vmem:[#allocation2 + $0x18c] sm:$0xff]
    %v1277 = vld [vmem:[#allocation2 + $0x1d0] sm:$0xff]
    %v1278 = vld [vmem:[#allocation2 + $0x214] sm:$0xff]
    %v1279 = vld [vmem:[#allocation4 + $0x60] ss:$0 sm:$0xff]
    %v1288 = vunpack.c.l.b16 %v1271
    %v1289 = vunpack.c.h.b16 %v1271
    %v1290 = vunpack.c.l.b16 %v1272
    %v1291 = vunpack.c.h.b16 %v1272
    %v1292 = vunpack.c.l.b16 %v1273
    %v1293 = vunpack.c.h.b16 %v1273
    %v1294 = vunpack.c.l.b16 %v1274
    %v1295 = vunpack.c.h.b16 %v1274
    %v1296 = vunpack.c.l.b16 %v1275
    %v1297 = vunpack.c.h.b16 %v1275
    %v1298 = vunpack.c.l.b16 %v1276
    %v1299 = vunpack.c.h.b16 %v1276
    %v1300 = vunpack.c.l.b16 %v1277
    %v1301 = vunpack.c.h.b16 %v1277
    %v1302 = vunpack.c.l.b16 %v1278
    %v1303 = vunpack.c.h.b16 %v1278
    %v1304 = vpack.c.b16 %v1290, %v1288
    %v1305 = vpack.c.b16 %v1291, %v1289
    %v1306 = vpack.c.b16 %v1294, %v1292
    %v1307 = vpack.c.b16 %v1295, %v1293
    %v1308 = vpack.c.b16 %v1298, %v1296
    %v1309 = vpack.c.b16 %v1299, %v1297
    %v1310 = vpack.c.b16 %v1302, %v1300
    %v1311 = vpack.c.b16 %v1303, %v1301
    %1320 = vmatpush.bf16.xpose.msra.mxu0 0
    %1321 = vmatpush.bf16.xpose.msra.mxu0 0
    %1322 = vmatpush.bf16.xpose.msra.mxu0 0
    %1323 = vmatpush.bf16.xpose.msra.mxu0 0
    %1324 = vmatpush.bf16.xpose.msra.mxu0 %v1310
    %1325 = vmatpush.bf16.xpose.msra.mxu0 %v1308
    %1326 = vmatpush.bf16.xpose.msra.mxu0 %v1306
    %1327 = vmatpush.bf16.xpose.msra.mxu0 %v1304
    %1328 = vmatmul.bf16.gmra.mxu0 %v1269
    %v1329 = vpop.f32.mrf.mxu0
    %v1330 = vadd.f32 %v1279, %v1329
    %v1331 = vpop.f32.mrf.mxu0
    %v1332 = vadd.f32 %v1279, %v1331
    %1333 = vdwg.mxu0
    %1334 = vmatpush.bf16.xpose.msra.mxu0 0
    %1335 = vmatpush.bf16.xpose.msra.mxu0 0
    %1336 = vmatpush.bf16.xpose.msra.mxu0 0
    %1337 = vmatpush.bf16.xpose.msra.mxu0 0
    %1338 = vmatpush.bf16.xpose.msra.mxu0 %v1311
    %1339 = vmatpush.bf16.xpose.msra.mxu0 %v1309
    %1340 = vmatpush.bf16.xpose.msra.mxu0 %v1307
    %1341 = vmatpush.bf16.xpose.msra.mxu0 %v1305
    %1342 = vmatmul.bf16.gmra.mxu0 %v1270
    %v1343 = vpop.f32.mrf.mxu0
    %v1344 = vadd.f32 %v1330, %v1343
    %v1345 = vpop.f32.mrf.mxu0
    %v1346 = vadd.f32 %v1332, %v1345
    %1347 = vdwg.mxu0
    %v1348 = vadd.f32 %v1090, %v1344
    %v1349 = vadd.f32 %v1091, %v1346
    %v1350 = vld [vmem:[#allocation4 + $0x61] ss:$0 sm:$0xff]
    %v1351 = vld [vmem:[#allocation4 + $0x62] ss:$0 sm:$0xff]
    %v1352 = vsel %vm148, %v1348, 0.0
    %1353 = vadd.xlane.f32.xlu0 %v1352
    %v1354 = vpop.xlane.xlu0 %1353
    %v1355 = vsel %vm148, %v1349, 0.0
    %1356 = vadd.xlane.f32.xlu0 %v1355
    %v1357 = vpop.xlane.xlu0 %1356
    %v1358 = vmul.f32 %v1354, %v161
    %v1359 = vmul.f32 %v1357, %v161
    %v1360 = vmul.f32 %v1348, %v1348
    %v1361 = vmul.f32 %v1349, %v1349
    %v1362 = vsel %vm148, %v1360, 0.0
    %1363 = vadd.xlane.f32.xlu0 %v1362
    %v1364 = vpop.xlane.xlu0 %1363
    %v1365 = vsel %vm148, %v1361, 0.0
    %1366 = vadd.xlane.f32.xlu0 %v1365
    %v1367 = vpop.xlane.xlu0 %1366
    %v1368 = vmul.f32 %v1364, %v161
    %v1369 = vmul.f32 %v1367, %v161
    %v1370 = vsub.f32 %v1348, %v1358
    %v1371 = vsub.f32 %v1349, %v1359
    %v1372 = vmul.f32 %v1358, %v1358
    %v1373 = vmul.f32 %v1359, %v1359
    %v1374 = vsub.f32 %v1368, %v1372
    %v1375 = vsub.f32 %v1369, %v1373
    %v1376 = vadd.f32 %v1374, 1e-05
    %v1377 = vadd.f32 %v1375, 1e-05
    %v1378 = vrsqrt.pop %v1376
    %v1379 = vmul.f32 %v1378, %v1376
    %v1380 = vmul.f32 %v1379, %v1378
    %v1381 = vmul.f32 0.5, %v1380
    %v1382 = vsub.f32 1.5, %v1381
    %v1383 = vmul.f32 %v1378, %v1382
    %vm1384 = vweird.f32 %v1376
    %vm1385 = vweird.f32 %v1378
    %vm1386 = vmor %vm1384, %vm1385
    %v1387 = vsel %vm1386, %v1378, %v1383
    %v1388 = vrsqrt.pop %v1377
    %v1389 = vmul.f32 %v1388, %v1377
    %v1390 = vmul.f32 %v1389, %v1388
    %v1391 = vmul.f32 0.5, %v1390
    %v1392 = vsub.f32 1.5, %v1391
    %v1393 = vmul.f32 %v1388, %v1392
    %vm1394 = vweird.f32 %v1377
    %vm1395 = vweird.f32 %v1388
    %vm1396 = vmor %vm1394, %vm1395
    %v1397 = vsel %vm1396, %v1388, %v1393
    %v1398 = vmul.f32 %v1370, %v1387
    %v1399 = vmul.f32 %v1371, %v1397
    %v1400 = vmul.f32 %v1398, %v1350
    %v1401 = vmul.f32 %v1399, %v1350
    %v1402 = vadd.f32 %v1400, %v1351
    %v1403 = vadd.f32 %v1401, %v1351
    %v1404 = vpack.c.bf16 %v1403, %v1402
    %v1405 = vld [vmem:[#allocation2 + $0x40] sm:$0xf]
    %v1406 = vld [vmem:[#allocation2 + $0x84] sm:$0xf]
    %v1407 = vld [vmem:[#allocation2 + $0xc8] sm:$0xf]
    %v1408 = vld [vmem:[#allocation2 + $0x10c] sm:$0xf]
    %v1409 = vld [vmem:[#allocation2 + $0x150] sm:$0xf]
    %v1410 = vld [vmem:[#allocation2 + $0x194] sm:$0xf]
    %v1411 = vld [vmem:[#allocation2 + $0x1d8] sm:$0xf]
    %v1412 = vld [vmem:[#allocation2 + $0x21c] sm:$0xf]
    %v1413 = vld [vmem:[#allocation4 + $0x63] ss:$0 sm:$0xff]
    %v1422 = vunpack.c.l.b16 %v1405
    %v1423 = vunpack.c.l.b16 %v1406
    %v1424 = vunpack.c.l.b16 %v1407
    %v1425 = vunpack.c.l.b16 %v1408
    %v1426 = vunpack.c.l.b16 %v1409
    %v1427 = vunpack.c.l.b16 %v1410
    %v1428 = vunpack.c.l.b16 %v1411
    %v1429 = vunpack.c.l.b16 %v1412
    %v1430 = vpack.c.b16 %v1423, %v1422
    %v1431 = vpack.c.b16 %v1425, %v1424
    %v1432 = vpack.c.b16 %v1427, %v1426
    %v1433 = vpack.c.b16 %v1429, %v1428
    %v1439 = vsel %vm148, %v1404, 0
    %1441 = vmatpush.bf16.msra.mxu0 0
    %1442 = vmatpush.bf16.msra.mxu0 0
    %1443 = vmatpush.bf16.msra.mxu0 0
    %1444 = vmatpush.bf16.msra.mxu0 0
    %1445 = vmatpush.bf16.msra.mxu0 %v1433
    %1446 = vmatpush.bf16.msra.mxu0 %v1432
    %1447 = vmatpush.bf16.msra.mxu0 %v1431
    %1448 = vmatpush.bf16.msra.mxu0 %v1430
    %1449 = vmatmul.bf16.gmra.mxu0 %v1439
    %v1450 = vpop.f32.mrf.mxu0
    %v1451 = vadd.f32 %v1413, %v1450
    %v1452 = vpop.f32.mrf.mxu0
    %v1453 = vadd.f32 %v1413, %v1452
    %1454 = vdwg.mxu0
    %v1455 = vcvt.s32.f32 %v58
    %vm1456 = vcmp.ge.s32.totalorder %v58, 8
    %vm1457 = vcmp.lt.s32.totalorder %v58, 14
    %vm1458 = vmand %vm1456, %vm1457
    %v1459 = vsel %vm1458, %v1451, -inf
    %v1460 = vsel %vm1458, %v1453, -inf
    %1461 = vmax.xlane.f32.xlu0 %v1459
    %v1462 = vpop.xlane.xlu0 %1461
    %1463 = vmax.xlane.f32.xlu0 %v1460
    %v1464 = vpop.xlane.xlu0 %1463
    %vm1465 = vcmp.eq.f32.partialorder %v1459, %v1462
    %vm1466 = vcmp.eq.f32.partialorder %v1460, %v1464
    %vm1467 = vmand %vm1458, %vm1465
    %vm1468 = vmand %vm1458, %vm1466
    %v1469 = vsel %vm1467, %v1455, 14.0
    %v1470 = vsel %vm1468, %v1455, 14.0
    %1471 = vmin.xlane.f32.xlu0 %v1469
    %v1472 = vpop.xlane.xlu0 %1471
    %1473 = vmin.xlane.f32.xlu0 %v1470
    %v1474 = vpop.xlane.xlu0 %1473
    %vm1475 = vcmp.eq.s32.totalorder %v58, 0
    %v1476 = vsub.f32 %v1472, 9.0
    %v1477 = vsub.f32 %v1474, 9.0
    %v1478 = vsel %vm1475, %v1476, %v1451
    %v1479 = vsel %vm1475, %v1477, %v1453
    %vm1480 = vcmp.ge.s32.totalorder %v58, 14
    %vm1481 = vcmp.lt.s32.totalorder %v58, 22
    %vm1482 = vmand %vm1480, %vm1481
    %v1483 = vsel %vm1482, %v1451, -inf
    %v1484 = vsel %vm1482, %v1453, -inf
    %1485 = vmax.xlane.f32.xlu0 %v1483
    %v1486 = vpop.xlane.xlu0 %1485
    %1487 = vmax.xlane.f32.xlu0 %v1484
    %v1488 = vpop.xlane.xlu0 %1487
    %vm1489 = vcmp.eq.f32.partialorder %v1483, %v1486
    %vm1490 = vcmp.eq.f32.partialorder %v1484, %v1488
    %vm1491 = vmand %vm1482, %vm1489
    %vm1492 = vmand %vm1482, %vm1490
    %v1493 = vsel %vm1491, %v1455, 22.0
    %v1494 = vsel %vm1492, %v1455, 22.0
    %1495 = vmin.xlane.f32.xlu0 %v1493
    %v1496 = vpop.xlane.xlu0 %1495
    %1497 = vmin.xlane.f32.xlu0 %v1494
    %v1498 = vpop.xlane.xlu0 %1497
    %vm1499 = vcmp.eq.s32.totalorder %v58, 1
    %v1500 = vsub.f32 %v1496, 15.0
    %v1501 = vsub.f32 %v1498, 15.0
    %v1502 = vsel %vm1499, %v1500, %v1478
    %v1503 = vsel %vm1499, %v1501, %v1479
    %1504 = vst [vmem:[%s5] sm:$0xff] %v1502
    %1505 = vst [vmem:[%s5 + $0x8] sm:$0xff] %v1503
    // Predicated region
    $region30: #{transformer_forward.1} parent=1 // pred_check
      _
    $region31: #{transformer_forward.1} parent=1 // pred_check_branch
      %1507 = sbr.rel (0) target = $region33
    $region32: #{transformer_forward.1} parent=1 // pred_region
      _
    $region33: #{transformer_forward.1} parent=1 // pred_fallthru
      _
    // Predicated region
    $region34: #{transformer_forward.1} parent=1 // pred_check
      _
    $region35: #{transformer_forward.1} parent=1 // pred_check_branch
      %1509 = sbr.rel (0) target = $region37
    $region36: #{transformer_forward.1} parent=1 // pred_region
      _
    $region37: #{transformer_forward.1} parent=1 // pred_fallthru
      _
    %1510 = vsyncpa [#allocation3], 1
    %1511 = vsyncpa [#allocation5], 1

</llo_original>
